<compile_context>
chip_gen: v7x
topology: tpu7x:2x2x1
jax: 0.10.0
libtpu: 0.0.40
codegen_flags: <defaults>
</compile_context>

<pallas_src>
import math
from functools import partial
from typing import Dict, List, Tuple

import jax
import jax.numpy as jnp
from jax.experimental import pallas as pl
from jax.experimental.pallas import tpu as pltpu

_LANE = 128
_DEFAULT_TILE = 2048  # lanes (time points) per grid step; multiple of 128


def _make_kernel(num_fns: int, layer_dims: Tuple[Tuple[int, int], ...]):
    """Kernel arg order: t_ref, w_0..w_{L-1}, b_0..b_{L-1}, out_ref.

    The activation slab h stays lane-dense: shape [width, TILE] where width is
    F*dout (all functions stacked along the sublane axis).
    """
    n_layers = len(layer_dims)
    F = num_fns

    def kernel(*refs):
        t_ref = refs[0]
        w_refs = refs[1:1 + n_layers]
        b_refs = refs[1 + n_layers:1 + 2 * n_layers]
        out_ref = refs[-1]
        T = t_ref.shape[-1]

        h = t_ref[...]                                    # [1, T], f32
        for i, (din, dout) in enumerate(layer_dims):
            w = w_refs[i][...]
            b = b_refs[i][...]
            last = (i == n_layers - 1)
            if i == 0:
                # 1 -> F*dout: outer product == VPU broadcast FMA.
                # (If this is also the last layer, w/b are [F,1] and h becomes
                #  the final [F, T] result directly.)
                h = w * h + b                             # [F*dout, T]
            elif last:
                # F*din -> F: per-function weighted reduction
                # (VPU multiply + XLU segmented sublane sum).
                hw = w * h                                # [F*din, T]
                h = jnp.sum(hw.reshape(F, din, T), axis=1) + b   # [F, T]
            else:
                # Block-diagonal square hidden layer: the only MXU op.
                h = jnp.dot(w, h, preferred_element_type=jnp.float32) + b
            if not last:                                  # hidden layers only
                h = jnp.tanh(h)
        out_ref[...] = h                                  # [F, TILE], unmasked vst

    return kernel


@partial(jax.jit, static_argnames=("num_fns", "layer_dims", "tile"))
def _fused_forward(t_flat, weights, biases, num_fns, layer_dims, tile):
    """t_flat: [N] f32; weights/biases: packed block-diag / column params.
    Returns [F, N] f32 (one row of predictions per function)."""
    n = t_flat.shape[0]
    F = num_fns

    # Fixed tile (no recompile churn); >= 2 batch blocks so v7x's 2 TCs both
    # get a grid step.  n_pad only varies in multiples of `tile`.
    nb = max(2, pl.cdiv(max(n, 1), tile))
    n_pad = nb * tile

    # Lane-dense input: one row with time points along the 128-lane axis.
    t_lane = jnp.zeros((1, n_pad), jnp.float32).at[0, :n].set(t_flat)

    kernel = _make_kernel(F, layer_dims)

    t_spec = pl.BlockSpec((1, tile), lambda bi: (0, bi))
    # Params are whole-array blocks with a constant index map: DMA'd once and
    # kept VMEM-resident across all batch blocks.
    w_specs = [pl.BlockSpec(w.shape, lambda bi: (0, 0)) for w in weights]
    b_specs = [pl.BlockSpec(b.shape, lambda bi: (0, 0)) for b in biases]
    out_spec = pl.BlockSpec((F, tile), lambda bi: (0, bi))

    # Explicit VMEM budget: double-buffered t/out tiles + resident params +
    # live activation slabs, with headroom; capped well below v7x's 64 MiB.
    widths = [F * dout for (_, dout) in layer_dims[:-1]] + [F]
    max_width = max([1] + widths)
    param_bytes = (sum(int(w.size) for w in weights)
                   + sum(int(b.size) for b in biases)) * 4
    est = 4 * tile * (2 * 1 + 2 * F + 3 * max_width) + 2 * param_bytes + (2 << 20)
    vmem_limit = int(min(max(est, 8 << 20), 48 << 20))

    out = pl.pallas_call(
        kernel,
        out_shape=jax.ShapeDtypeStruct((F, n_pad), jnp.float32),
        grid=(nb,),
        in_specs=[t_spec] + w_specs + b_specs,
        out_specs=out_spec,
        compiler_params=pltpu.CompilerParams(
            dimension_semantics=("parallel",),
            vmem_limit_bytes=vmem_limit),
    )(t_lane, *weights, *biases)

    return out[:, :n]                                     # [F, N]


class EquationsModelPallas:
    """Pallas port of a dict of LinearModel MLPs (one per named function),
    all evaluated by a single fused, block-diagonally-stacked pallas_call.

    Note: F * max(features) should stay <= 128 (v5e MXU) / 256 (v6e/v7x) for
    full MXU fill of the block-diagonal hidden layer; split into groups beyond
    that if the model is scaled up.
    """

    def __init__(self, functions: List[str], features: List[int], key,
                 tile: int = _DEFAULT_TILE):
        self.functions = list(functions)
        self.num_fns = len(self.functions)
        dims = [1] + list(features) + [1]
        self.layer_dims = tuple((dims[i], dims[i + 1])
                                for i in range(len(dims) - 1))
        self.tile = int(tile)

        F = self.num_fns
        L = len(self.layer_dims)

        # --- per-function params in PyTorch nn.Linear layout / default init ---
        raw_w = [[] for _ in range(L)]   # [dout, din]
        raw_b = [[] for _ in range(L)]   # [dout]
        for _ in range(F):
            for li, (din, dout) in enumerate(self.layer_dims):
                key, wk, bk = jax.random.split(key, 3)
                bound = 1.0 / math.sqrt(float(din))
                raw_w[li].append(jax.random.uniform(
                    wk, (dout, din), jnp.float32, minval=-bound, maxval=bound))
                raw_b[li].append(jax.random.uniform(
                    bk, (dout,), jnp.float32, minval=-bound, maxval=bound))
        # Kept for the pure-JAX reference check.
        self.ref_weights = tuple(jnp.stack(ws) for ws in raw_w)  # [F, dout, din]
        self.ref_biases = tuple(jnp.stack(bs) for bs in raw_b)   # [F, dout]

        # --- packed (block-diagonal / column) params for the fused kernel ---
        packed_w, packed_b = [], []
        for li, (din, dout) in enumerate(self.layer_dims):
            last = (li == L - 1)
            w_f, b_f = raw_w[li], raw_b[li]
            if li == 0:
                # 1 -> dout columns, stacked over functions -> [F*dout, 1]
                packed_w.append(jnp.concatenate(
                    [w.reshape(dout, 1) for w in w_f], axis=0))
            elif last:
                # din -> 1 rows, transposed to columns, stacked -> [F*din, 1]
                packed_w.append(jnp.concatenate(
                    [w.reshape(din, 1) for w in w_f], axis=0))
            else:
                # Block-diagonal [F*dout, F*din]
                bd = jnp.zeros((F * dout, F * din), jnp.float32)
                for f in range(F):
                    bd = bd.at[f * dout:(f + 1) * dout,
                               f * din:(f + 1) * din].set(w_f[f])
                packed_w.append(bd)
            if last:
                packed_b.append(jnp.stack(b_f).reshape(F, 1))            # [F, 1]
            else:
                packed_b.append(jnp.concatenate(
                    [b.reshape(dout, 1) for b in b_f], axis=0))          # [F*dout, 1]
        self.weights = tuple(packed_w)
        self.biases = tuple(packed_b)
        self.key = key

    def __call__(self, t) -> Dict[str, jax.Array]:
        t_flat = jnp.asarray(t, jnp.float32).reshape(-1)
        n = t_flat.shape[0]
        out = _fused_forward(t_flat, self.weights, self.biases,
                             self.num_fns, self.layer_dims, self.tile)   # [F, N]
        return {fn: out[i].reshape(n, 1)
                for i, fn in enumerate(self.functions)}


def _reference_forward(t_flat, ref_weights, ref_biases, f_idx):
    """Pure-jnp replica of PyTorch LinearModel.forward for function f_idx."""
    h = t_flat.reshape(-1, 1)
    L = len(ref_weights)
    for li in range(L):
        w = ref_weights[li][f_idx]          # [dout, din]
        b = ref_biases[li][f_idx]           # [dout]
        h = h @ w.T + b
        if li < L - 1:
            h = jnp.tanh(h)
    return h


# TODO(synk): the PyTorch module accepts an arbitrary activation callable;
# this port hardcodes tanh (the hidden-layer activation used by the demo).

if __name__ == "__main__":
    key = jax.random.PRNGKey(0)

    functions = ["x", "y"]      # system of two equations
    features = [32, 32]         # two hidden layers of width 32
    batch = 8                   # number of time points

    key, tkey = jax.random.split(key)
    t = jax.random.uniform(tkey, (batch, 1), jnp.float32)  # input "time" tensor

    model = EquationsModelPallas(functions, features, key)
    out = model(t)

    for i, fn in enumerate(functions):
        y = jax.block_until_ready(out[fn])
        assert y.shape == (batch, 1), y.shape
        assert y.dtype == jnp.float32
        ref = _reference_forward(jnp.asarray(t, jnp.float32).reshape(-1),
                                 model.ref_weights, model.ref_biases, i)
        assert jnp.allclose(y, ref, atol=5e-5, rtol=5e-5), (
            f"mismatch for {fn}: max err {float(jnp.max(jnp.abs(y - ref)))}")

    print("KERNEL_OK")
</pallas_src>

<mosaic_0001>
module attributes {stable_mosaic.version = 11 : i64} {
  func.func @kernel(%arg0: i32, %arg1: memref<1x2048xf32, #tpu.memory_space<vmem>>, %arg2: memref<64x1xf32, #tpu.memory_space<vmem>>, %arg3: memref<64x64xf32, #tpu.memory_space<vmem>>, %arg4: memref<64x1xf32, #tpu.memory_space<vmem>>, %arg5: memref<64x1xf32, #tpu.memory_space<vmem>>, %arg6: memref<64x1xf32, #tpu.memory_space<vmem>>, %arg7: memref<2x1xf32, #tpu.memory_space<vmem>>, %arg8: memref<2x2048xf32, #tpu.memory_space<vmem>>) attributes {dimension_semantics = [#tpu.dimension_semantics<parallel>], iteration_bounds = array<i64: 2>, scalar_prefetch = 0 : i64, scratch_operands = 0 : i64, tpu.core_type = #tpu.core_type<tc>, window_params = [{transform_indices = @transform_0, window_bounds = array<i64: 1, 2048>}, {pipeline_mode = #tpu.pipeline_mode<synchronous>, transform_indices = @transform_1, window_bounds = array<i64: 64, 1>}, {pipeline_mode = #tpu.pipeline_mode<synchronous>, transform_indices = @transform_2, window_bounds = array<i64: 64, 64>}, {pipeline_mode = #tpu.pipeline_mode<synchronous>, transform_indices = @transform_3, window_bounds = array<i64: 64, 1>}, {pipeline_mode = #tpu.pipeline_mode<synchronous>, transform_indices = @transform_4, window_bounds = array<i64: 64, 1>}, {pipeline_mode = #tpu.pipeline_mode<synchronous>, transform_indices = @transform_5, window_bounds = array<i64: 64, 1>}, {pipeline_mode = #tpu.pipeline_mode<synchronous>, transform_indices = @transform_6, window_bounds = array<i64: 2, 1>}, {transform_indices = @transform_7, window_bounds = array<i64: 2, 2048>}]} {
    %c0 = arith.constant 0 : index
    %c0_0 = arith.constant 0 : index
    %0 = vector.load %arg1[%c0, %c0_0] : memref<1x2048xf32, #tpu.memory_space<vmem>>, vector<1x2048xf32>
    %c0_1 = arith.constant 0 : index
    %c0_2 = arith.constant 0 : index
    %1 = vector.load %arg2[%c0_1, %c0_2] : memref<64x1xf32, #tpu.memory_space<vmem>>, vector<64x1xf32>
    %c0_3 = arith.constant 0 : index
    %c0_4 = arith.constant 0 : index
    %2 = vector.load %arg5[%c0_3, %c0_4] : memref<64x1xf32, #tpu.memory_space<vmem>>, vector<64x1xf32>
    %3 = vector.broadcast %1 : vector<64x1xf32> to vector<64x2048xf32>
    %4 = vector.broadcast %0 : vector<1x2048xf32> to vector<64x2048xf32>
    %5 = arith.mulf %3, %4 : vector<64x2048xf32>
    %6 = vector.broadcast %2 : vector<64x1xf32> to vector<64x2048xf32>
    %7 = arith.addf %5, %6 : vector<64x2048xf32>
    %8 = math.tanh %7 : vector<64x2048xf32>
    %c0_5 = arith.constant 0 : index
    %c0_6 = arith.constant 0 : index
    %9 = vector.load %arg3[%c0_5, %c0_6] : memref<64x64xf32, #tpu.memory_space<vmem>>, vector<64x64xf32>
    %c0_7 = arith.constant 0 : index
    %c0_8 = arith.constant 0 : index
    %10 = vector.load %arg6[%c0_7, %c0_8] : memref<64x1xf32, #tpu.memory_space<vmem>>, vector<64x1xf32>
    %cst = arith.constant dense<0.000000e+00> : vector<64x2048xf32>
    %11 = tpu.matmul %9, %8, %cst {dimension_numbers = #tpu.dot_dimension_numbers<[1], [0], [0], [1], [0, 0, 1, 1], [], []>} : vector<64x64xf32>, vector<64x2048xf32>, vector<64x2048xf32> -> vector<64x2048xf32>
    %12 = vector.broadcast %10 : vector<64x1xf32> to vector<64x2048xf32>
    %13 = arith.addf %11, %12 : vector<64x2048xf32>
    %14 = math.tanh %13 : vector<64x2048xf32>
    %c0_9 = arith.constant 0 : index
    %c0_10 = arith.constant 0 : index
    %15 = vector.load %arg4[%c0_9, %c0_10] : memref<64x1xf32, #tpu.memory_space<vmem>>, vector<64x1xf32>
    %c0_11 = arith.constant 0 : index
    %c0_12 = arith.constant 0 : index
    %16 = vector.load %arg7[%c0_11, %c0_12] : memref<2x1xf32, #tpu.memory_space<vmem>>, vector<2x1xf32>
    %17 = vector.broadcast %15 : vector<64x1xf32> to vector<64x2048xf32>
    %18 = arith.mulf %17, %14 : vector<64x2048xf32>
    %19 = vector.shape_cast %18 : vector<64x2048xf32> to vector<2x32x2048xf32>
    %cst_13 = arith.constant dense<0.000000e+00> : vector<2x2048xf32>
    %20 = vector.multi_reduction <add>, %19, %cst_13 [1] : vector<2x32x2048xf32> to vector<2x2048xf32>
    %21 = vector.broadcast %16 : vector<2x1xf32> to vector<2x2048xf32>
    %22 = arith.addf %20, %21 : vector<2x2048xf32>
    %c0_14 = arith.constant 0 : index
    %c0_15 = arith.constant 0 : index
    %23 = vector.load %arg8[%c0_14, %c0_15] : memref<2x2048xf32, #tpu.memory_space<vmem>>, vector<2x2048xf32>
    tpu.vector_store %arg8[%c0_14, %c0_15], %22 {strides = array<i32>} : memref<2x2048xf32, #tpu.memory_space<vmem>>, vector<2x2048xf32>,
    return
  }
  func.func @transform_0(%arg0: i32) -> (i32, i32) {
    %c0_i32 = arith.constant 0 : i32
    %c0_i32_0 = arith.constant 0 : i32
    return %c0_i32, %arg0 : i32, i32
  }
  func.func @transform_1(%arg0: i32) -> (i32, i32) {
    %c0_i32 = arith.constant 0 : i32
    %c0_i32_0 = arith.constant 0 : i32
    %c0_i32_1 = arith.constant 0 : i32
    return %c0_i32, %c0_i32_0 : i32, i32
  }
  func.func @transform_2(%arg0: i32) -> (i32, i32) {
    %c0_i32 = arith.constant 0 : i32
    %c0_i32_0 = arith.constant 0 : i32
    %c0_i32_1 = arith.constant 0 : i32
    return %c0_i32, %c0_i32_0 : i32, i32
  }
  func.func @transform_3(%arg0: i32) -> (i32, i32) {
    %c0_i32 = arith.constant 0 : i32
    %c0_i32_0 = arith.constant 0 : i32
    %c0_i32_1 = arith.constant 0 : i32
    return %c0_i32, %c0_i32_0 : i32, i32
  }
  func.func @transform_4(%arg0: i32) -> (i32, i32) {
    %c0_i32 = arith.constant 0 : i32
    %c0_i32_0 = arith.constant 0 : i32
    %c0_i32_1 = arith.constant 0 : i32
    return %c0_i32, %c0_i32_0 : i32, i32
  }
  func.func @transform_5(%arg0: i32) -> (i32, i32) {
    %c0_i32 = arith.constant 0 : i32
    %c0_i32_0 = arith.constant 0 : i32
    %c0_i32_1 = arith.constant 0 : i32
    return %c0_i32, %c0_i32_0 : i32, i32
  }
  func.func @transform_6(%arg0: i32) -> (i32, i32) {
    %c0_i32 = arith.constant 0 : i32
    %c0_i32_0 = arith.constant 0 : i32
    %c0_i32_1 = arith.constant 0 : i32
    return %c0_i32, %c0_i32_0 : i32, i32
  }
  func.func @transform_7(%arg0: i32) -> (i32, i32) {
    %c0_i32 = arith.constant 0 : i32
    %c0_i32_0 = arith.constant 0 : i32
    return %c0_i32, %arg0 : i32, i32
  }
}

</mosaic_0001>

<llo_original>
// kernel: _fused_forward.1
$region0: #{_fused_forward.1}
  #allocation0 [shape = 'u32[]', space=smem, size = 0x4, offset = 0x4, fixed_abs, tag = 'smem constant byte address 0x4 - core index']
  #allocation1 [shape = 'u32[144,128]{1,0:T(1,128)}', space=vmem, size = 0x12000, scoped, tag = 'internal scratch']
  %s0 = inlined_call_operand.vmem [shape: f32[1,4096], index: 0, kind: input, shape index: {}]
  %s1 = inlined_call_operand.vmem [shape: f32[64,1], index: 1, kind: input, shape index: {}]
  %s2 = inlined_call_operand.vmem [shape: f32[64,64], index: 2, kind: input, shape index: {}]
  %s3 = inlined_call_operand.vmem [shape: f32[64,1], index: 3, kind: input, shape index: {}]
  %s4 = inlined_call_operand.vmem [shape: f32[64,1], index: 4, kind: input, shape index: {}]
  %s5 = inlined_call_operand.vmem [shape: f32[64,1], index: 5, kind: input, shape index: {}]
  %s6 = inlined_call_operand.vmem [shape: f32[2,1], index: 6, kind: input, shape index: {}]
  %s7 = inlined_call_operand.vmem [shape: f32[2,4096], index: 7, kind: output, shape index: {}]
  %s8 = sld [smem:[#allocation0]]
  $region61: #{_fused_forward.1} parent=0
    _
  %s10 = ssub.s32 1, %s8
  %s11 = scalar_select 0, %s10, %s8
  loop: start=0, step=1, limit=4
  $region2: #{_fused_forward.1} parent=0 // loop_pre_header
    _
  $region3: #{_fused_forward.1} parent=0 // loop_header
    %s13 = sphi 0, %s17
    %p14 = scmp.ge.s32.totalorder %s13, 4
    %s23 = sphi 0, %s25
    %s26 = sphi 0, %s23
    %s27 = sphi 0, %s26
    %s43 = sphi 0, %s27
    %s47 = sphi 0, %s47
    %s49 = sphi 0, %s47
    %s50 = sphi 0, %s49
    %s64 = sphi 0, %s50
    %s68 = sphi 0, %s68
    %s70 = sphi 0, %s68
    %s71 = sphi 0, %s70
    %s85 = sphi 0, %s71
    %s89 = sphi 0, %s89
    %s91 = sphi 0, %s89
    %s92 = sphi 0, %s91
    %s106 = sphi 0, %s92
    %s110 = sphi 0, %s110
    %s112 = sphi 0, %s110
    %s113 = sphi 0, %s112
    %s127 = sphi 0, %s113
    %s131 = sphi 0, %s131
    %s133 = sphi 0, %s131
    %s134 = sphi 0, %s133
    %s148 = sphi 0, %s134
    %s152 = sphi 0, %s152
    %s154 = sphi 0, %s152
    %s155 = sphi 0, %s154
    %s169 = sphi 0, %s155
    %s175 = sphi 0, %s177
    %s178 = sphi 0, %s175
    %s179 = sphi 0, %s178
    %s195 = sphi 0, %s179
  $region4: #{_fused_forward.1} parent=0 // loop_header_branch
    %16 = sbr.rel (%p14) target = $region8
  $region5: #{_fused_forward.1} parent=0 // loop_body
    %s18 = ssub.s32 %s13, 1
    %s19 = ssub.s32 %s13, 2
    %s20 = sadd.s32 %s13, 1
    %s21 = ssub.s32 %s13, %s20
    %p22 = scmp.eq.s32.totalorder %s21, 0
    %s24 = sadd.s32 %s23, 1
    %s25 = scalar_select %p22, %s23, %s24
    %p28 = pneg %p22
    %p29 = scmp.eq.s32.totalorder %s13, 1
    %p30 = por %p28, %p29
    %p31 = scmp.ne.s32.totalorder %s23, %s26
    %p32 = scmp.eq.s32.totalorder %s13, 0
    %p33 = por %p31, %p32
    %p34 = scmp.ne.s32.totalorder %s23, %s26
    %p35 = scmp.eq.s32.totalorder %s18, 1
    %p36 = por %p34, %p35
    %p37 = scmp.ne.s32.totalorder %s26, %s27
    %p38 = scmp.eq.s32.totalorder %s18, 0
    %p39 = por %p37, %p38
    %p40 = scmp.ne.s32.totalorder %s26, %s27
    %p41 = scmp.eq.s32.totalorder %s19, 1
    %p42 = por %p40, %p41
    %p44 = scmp.ne.s32.totalorder %s27, %s43
    %p45 = scmp.eq.s32.totalorder %s19, 0
    %p46 = por %p44, %p45
    %s48 = sadd.s32 %s47, 1
    %p51 = scmp.eq.s32.totalorder %s13, 1
    %p52 = scmp.ne.s32.totalorder %s47, %s49
    %p53 = scmp.eq.s32.totalorder %s13, 0
    %p54 = por %p52, %p53
    %p55 = scmp.ne.s32.totalorder %s47, %s49
    %p56 = scmp.eq.s32.totalorder %s18, 1
    %p57 = por %p55, %p56
    %p58 = scmp.ne.s32.totalorder %s49, %s50
    %p59 = scmp.eq.s32.totalorder %s18, 0
    %p60 = por %p58, %p59
    %p61 = scmp.ne.s32.totalorder %s49, %s50
    %p62 = scmp.eq.s32.totalorder %s19, 1
    %p63 = por %p61, %p62
    %p65 = scmp.ne.s32.totalorder %s50, %s64
    %p66 = scmp.eq.s32.totalorder %s19, 0
    %p67 = por %p65, %p66
    %s69 = sadd.s32 %s68, 1
    %p72 = scmp.eq.s32.totalorder %s13, 1
    %p73 = scmp.ne.s32.totalorder %s68, %s70
    %p74 = scmp.eq.s32.totalorder %s13, 0
    %p75 = por %p73, %p74
    %p76 = scmp.ne.s32.totalorder %s68, %s70
    %p77 = scmp.eq.s32.totalorder %s18, 1
    %p78 = por %p76, %p77
    %p79 = scmp.ne.s32.totalorder %s70, %s71
    %p80 = scmp.eq.s32.totalorder %s18, 0
    %p81 = por %p79, %p80
    %p82 = scmp.ne.s32.totalorder %s70, %s71
    %p83 = scmp.eq.s32.totalorder %s19, 1
    %p84 = por %p82, %p83
    %p86 = scmp.ne.s32.totalorder %s71, %s85
    %p87 = scmp.eq.s32.totalorder %s19, 0
    %p88 = por %p86, %p87
    %s90 = sadd.s32 %s89, 1
    %p93 = scmp.eq.s32.totalorder %s13, 1
    %p94 = scmp.ne.s32.totalorder %s89, %s91
    %p95 = scmp.eq.s32.totalorder %s13, 0
    %p96 = por %p94, %p95
    %p97 = scmp.ne.s32.totalorder %s89, %s91
    %p98 = scmp.eq.s32.totalorder %s18, 1
    %p99 = por %p97, %p98
    %p100 = scmp.ne.s32.totalorder %s91, %s92
    %p101 = scmp.eq.s32.totalorder %s18, 0
    %p102 = por %p100, %p101
    %p103 = scmp.ne.s32.totalorder %s91, %s92
    %p104 = scmp.eq.s32.totalorder %s19, 1
    %p105 = por %p103, %p104
    %p107 = scmp.ne.s32.totalorder %s92, %s106
    %p108 = scmp.eq.s32.totalorder %s19, 0
    %p109 = por %p107, %p108
    %s111 = sadd.s32 %s110, 1
    %p114 = scmp.eq.s32.totalorder %s13, 1
    %p115 = scmp.ne.s32.totalorder %s110, %s112
    %p116 = scmp.eq.s32.totalorder %s13, 0
    %p117 = por %p115, %p116
    %p118 = scmp.ne.s32.totalorder %s110, %s112
    %p119 = scmp.eq.s32.totalorder %s18, 1
    %p120 = por %p118, %p119
    %p121 = scmp.ne.s32.totalorder %s112, %s113
    %p122 = scmp.eq.s32.totalorder %s18, 0
    %p123 = por %p121, %p122
    %p124 = scmp.ne.s32.totalorder %s112, %s113
    %p125 = scmp.eq.s32.totalorder %s19, 1
    %p126 = por %p124, %p125
    %p128 = scmp.ne.s32.totalorder %s113, %s127
    %p129 = scmp.eq.s32.totalorder %s19, 0
    %p130 = por %p128, %p129
    %s132 = sadd.s32 %s131, 1
    %p135 = scmp.eq.s32.totalorder %s13, 1
    %p136 = scmp.ne.s32.totalorder %s131, %s133
    %p137 = scmp.eq.s32.totalorder %s13, 0
    %p138 = por %p136, %p137
    %p139 = scmp.ne.s32.totalorder %s131, %s133
    %p140 = scmp.eq.s32.totalorder %s18, 1
    %p141 = por %p139, %p140
    %p142 = scmp.ne.s32.totalorder %s133, %s134
    %p143 = scmp.eq.s32.totalorder %s18, 0
    %p144 = por %p142, %p143
    %p145 = scmp.ne.s32.totalorder %s133, %s134
    %p146 = scmp.eq.s32.totalorder %s19, 1
    %p147 = por %p145, %p146
    %p149 = scmp.ne.s32.totalorder %s134, %s148
    %p150 = scmp.eq.s32.totalorder %s19, 0
    %p151 = por %p149, %p150
    %s153 = sadd.s32 %s152, 1
    %p156 = scmp.eq.s32.totalorder %s13, 1
    %p157 = scmp.ne.s32.totalorder %s152, %s154
    %p158 = scmp.eq.s32.totalorder %s13, 0
    %p159 = por %p157, %p158
    %p160 = scmp.ne.s32.totalorder %s152, %s154
    %p161 = scmp.eq.s32.totalorder %s18, 1
    %p162 = por %p160, %p161
    %p163 = scmp.ne.s32.totalorder %s154, %s155
    %p164 = scmp.eq.s32.totalorder %s18, 0
    %p165 = por %p163, %p164
    %p166 = scmp.ne.s32.totalorder %s154, %s155
    %p167 = scmp.eq.s32.totalorder %s19, 1
    %p168 = por %p166, %p167
    %p170 = scmp.ne.s32.totalorder %s155, %s169
    %p171 = scmp.eq.s32.totalorder %s19, 0
    %p172 = por %p170, %p171
    %s173 = ssub.s32 %s13, %s20
    %p174 = scmp.eq.s32.totalorder %s173, 0
    %s176 = sadd.s32 %s175, 1
    %s177 = scalar_select %p174, %s175, %s176
    %p180 = pneg %p174
    %p181 = scmp.eq.s32.totalorder %s13, 1
    %p182 = por %p180, %p181
    %p183 = scmp.ne.s32.totalorder %s175, %s178
    %p184 = scmp.eq.s32.totalorder %s13, 0
    %p185 = por %p183, %p184
    %p186 = scmp.ne.s32.totalorder %s175, %s178
    %p187 = scmp.eq.s32.totalorder %s18, 1
    %p188 = por %p186, %p187
    %p189 = scmp.ne.s32.totalorder %s178, %s179
    %p190 = scmp.eq.s32.totalorder %s18, 0
    %p191 = por %p189, %p190
    %p192 = scmp.ne.s32.totalorder %s178, %s179
    %p193 = scmp.eq.s32.totalorder %s19, 1
    %p194 = por %p192, %p193
    %p196 = scmp.ne.s32.totalorder %s179, %s195
    %p197 = scmp.eq.s32.totalorder %s19, 0
    %p198 = por %p196, %p197
    %p199 = scmp.le.s32.totalorder 1, %s13
    %p200 = scmp.lt.s32.totalorder %s13, 3
    %p201 = pnand %p199, %p200
    %p202 = pneg %p201
    // Predicated region
    $region9: #{_fused_forward.1} parent=5 // pred_check
      _
    $region10: #{_fused_forward.1} parent=5 // pred_check_branch
      %204 = sbr.rel (%p201) target = $region12
    $region11: #{_fused_forward.1} parent=5 // pred_region
      %s205 = ssub.s32 %s13, 1
      // Predicated region
      $region13: #{_fused_forward.1} parent=11 // pred_check
        %p206 = pneg %p60
      $region14: #{_fused_forward.1} parent=11 // pred_check_branch
        %208 = sbr.rel (%p206) target = $region16
      $region15: #{_fused_forward.1} parent=11 // pred_region
        _
      $region16: #{_fused_forward.1} parent=11 // pred_fallthru
        _
      // Predicated region
      $region17: #{_fused_forward.1} parent=11 // pred_check
        %p209 = pneg %p81
      $region18: #{_fused_forward.1} parent=11 // pred_check_branch
        %211 = sbr.rel (%p209) target = $region20
      $region19: #{_fused_forward.1} parent=11 // pred_region
        _
      $region20: #{_fused_forward.1} parent=11 // pred_fallthru
        _
      // Predicated region
      $region21: #{_fused_forward.1} parent=11 // pred_check
        %p212 = pneg %p102
      $region22: #{_fused_forward.1} parent=11 // pred_check_branch
        %214 = sbr.rel (%p212) target = $region24
      $region23: #{_fused_forward.1} parent=11 // pred_region
        _
      $region24: #{_fused_forward.1} parent=11 // pred_fallthru
        _
      // Predicated region
      $region25: #{_fused_forward.1} parent=11 // pred_check
        %p215 = pneg %p123
      $region26: #{_fused_forward.1} parent=11 // pred_check_branch
        %217 = sbr.rel (%p215) target = $region28
      $region27: #{_fused_forward.1} parent=11 // pred_region
        _
      $region28: #{_fused_forward.1} parent=11 // pred_fallthru
        _
      // Predicated region
      $region29: #{_fused_forward.1} parent=11 // pred_check
        %p218 = pneg %p144
      $region30: #{_fused_forward.1} parent=11 // pred_check_branch
        %220 = sbr.rel (%p218) target = $region32
      $region31: #{_fused_forward.1} parent=11 // pred_region
        _
      $region32: #{_fused_forward.1} parent=11 // pred_fallthru
        _
      // Predicated region
      $region33: #{_fused_forward.1} parent=11 // pred_check
        %p221 = pneg %p165
      $region34: #{_fused_forward.1} parent=11 // pred_check_branch
        %223 = sbr.rel (%p221) target = $region36
      $region35: #{_fused_forward.1} parent=11 // pred_region
        _
      $region36: #{_fused_forward.1} parent=11 // pred_fallthru
        _
    $region12: #{_fused_forward.1} parent=5 // pred_fallthru
      _
    %p224 = scmp.lt.s32.totalorder %s13, 2
    // Predicated region
    $region37: #{_fused_forward.1} parent=5 // pred_check
      %p225 = pneg %p224
    $region38: #{_fused_forward.1} parent=5 // pred_check_branch
      %227 = sbr.rel (%p225) target = $region40
    $region39: #{_fused_forward.1} parent=5 // pred_region
      // Predicated region
      $region41: #{_fused_forward.1} parent=39 // pred_check
        %p228 = pneg %p33
      $region42: #{_fused_forward.1} parent=39 // pred_check_branch
        %230 = sbr.rel (%p228) target = $region44
      $region43: #{_fused_forward.1} parent=39 // pred_region
        %s231 = smul.u32 16, %s13
        %p232 = scmp.lt.s32.totalorder %s231, 31
        %s233 = scalar_select %p232, %s231, 31
        %s234 = scalar_lea.vmem %s0, %s233
        %s235 = smul.u32 16, %s13
      $region44: #{_fused_forward.1} parent=39 // pred_fallthru
        _
    $region40: #{_fused_forward.1} parent=5 // pred_fallthru
      _
    %p236 = scmp.le.s32.totalorder 1, %s13
    %p237 = scmp.lt.s32.totalorder %s13, 3
    %p238 = pnand %p236, %p237
    %p239 = pneg %p238
    // Predicated region
    $region45: #{_fused_forward.1} parent=5 // pred_check
      _
    $region46: #{_fused_forward.1} parent=5 // pred_check_branch
      %241 = sbr.rel (%p238) target = $region48
    $region47: #{_fused_forward.1} parent=5 // pred_region
      %s242 = ssub.s32 %s13, 1
      %s243 = smul.u32 16, %s18
      %p244 = scmp.lt.s32.totalorder %s243, 31
      %s245 = scalar_select %p244, %s243, 31
      %s246 = scalar_lea.vmem %s0, %s245
      %p247 = pneg %p39
      %p248 = pneg %p36
      %p249 = pneg %p60
      %p250 = pneg %p57
      %p251 = pneg %p81
      %p252 = pneg %p78
      %p253 = pneg %p102
      %p254 = pneg %p99
      %p255 = pneg %p123
      %p256 = pneg %p120
      %p257 = pneg %p144
      %p258 = pneg %p141
      %p259 = pneg %p165
      %p260 = pneg %p162
      %p261 = pneg %p191
      %p262 = pneg %p188
      %s263 = smul.u32 16, %s18
      %p264 = scmp.lt.s32.totalorder %s263, 31
      %s265 = scalar_select %p264, %s263, 31
      %s266 = smul.addr %s265, 2
      %s267 = scalar_lea.vmem %s7, %s266
      %s268 = smul.u32 16, %s18
      %p269 = scmp.lt.s32.totalorder %s268, 31
      %s270 = scalar_select %p269, %s268, 31
      %s271 = scalar_lea.vmem %s0, %s270
      %s272 = smul.u32 16, %s18
      %s273 = smul.u32 16, %s18
      %p274 = scmp.lt.s32.totalorder %s273, 31
      %s275 = scalar_select %p274, %s273, 31
      %s276 = smul.addr %s275, 2
      %s277 = scalar_lea.vmem %s7, %s276
      %s278 = smul.u32 16, %s18
      %v279 = vld [vmem:[%s271] sm:$0xff]
      %v280 = vld [vmem:[%s271 + $0x8] sm:$0xff]
      %v281 = vld [vmem:[%s1] sm:$0xff]
      %v282 = vld [vmem:[%s1 + $0x8] sm:$0xff]
      %v283 = vld [vmem:[%s1 + $0x10] sm:$0xff]
      %v284 = vld [vmem:[%s1 + $0x18] sm:$0xff]
      %v285 = vld [vmem:[%s1 + $0x20] sm:$0xff]
      %v286 = vld [vmem:[%s1 + $0x28] sm:$0xff]
      %v287 = vld [vmem:[%s1 + $0x30] sm:$0xff]
      %v288 = vld [vmem:[%s1 + $0x38] sm:$0xff]
      %v289 = vld [vmem:[%s4] sm:$0xff]
      %v290 = vld [vmem:[%s4 + $0x8] sm:$0xff]
      %v291 = vld [vmem:[%s4 + $0x10] sm:$0xff]
      %v292 = vld [vmem:[%s4 + $0x18] sm:$0xff]
      %v293 = vld [vmem:[%s4 + $0x20] sm:$0xff]
      %v294 = vld [vmem:[%s4 + $0x28] sm:$0xff]
      %v295 = vld [vmem:[%s4 + $0x30] sm:$0xff]
      %v296 = vld [vmem:[%s4 + $0x38] sm:$0xff]
      %298 = vset.pattern.permute.xlu0 0
      %299 = vperm.xlu0 %298, %v281
      %v300 = vpop.permute.xlu0 %299
      %303 = vset.pattern.permute.xlu0 0
      %304 = vperm.xlu0 %303, %v282
      %v305 = vpop.permute.xlu0 %304
      %308 = vset.pattern.permute.xlu0 0
      %309 = vperm.xlu0 %308, %v283
      %v310 = vpop.permute.xlu0 %309
      %313 = vset.pattern.permute.xlu0 0
      %314 = vperm.xlu0 %313, %v284
      %v315 = vpop.permute.xlu0 %314
      %318 = vset.pattern.permute.xlu0 0
      %319 = vperm.xlu0 %318, %v285
      %v320 = vpop.permute.xlu0 %319
      %323 = vset.pattern.permute.xlu0 0
      %324 = vperm.xlu0 %323, %v286
      %v325 = vpop.permute.xlu0 %324
      %328 = vset.pattern.permute.xlu0 0
      %329 = vperm.xlu0 %328, %v287
      %v330 = vpop.permute.xlu0 %329
      %333 = vset.pattern.permute.xlu0 0
      %334 = vperm.xlu0 %333, %v288
      %v335 = vpop.permute.xlu0 %334
      %v339 = vlaneseq
      %v340 = vshrl.u32 %v339, 7
      %v341 = vsub.s32 0, %v340
      %v342 = vrot.slane %v279, %v341
      %v343 = vlaneseq
      %v344 = vshrl.u32 %v343, 7
      %v345 = vsub.s32 1, %v344
      %v346 = vrot.slane %v279, %v345
      %v347 = vlaneseq
      %v348 = vshrl.u32 %v347, 7
      %v349 = vsub.s32 2, %v348
      %v350 = vrot.slane %v279, %v349
      %v351 = vlaneseq
      %v352 = vshrl.u32 %v351, 7
      %v353 = vsub.s32 3, %v352
      %v354 = vrot.slane %v279, %v353
      %v355 = vlaneseq
      %v356 = vshrl.u32 %v355, 7
      %v357 = vsub.s32 4, %v356
      %v358 = vrot.slane %v279, %v357
      %v359 = vlaneseq
      %v360 = vshrl.u32 %v359, 7
      %v361 = vsub.s32 5, %v360
      %v362 = vrot.slane %v279, %v361
      %v363 = vlaneseq
      %v364 = vshrl.u32 %v363, 7
      %v365 = vsub.s32 6, %v364
      %v366 = vrot.slane %v279, %v365
      %v367 = vlaneseq
      %v368 = vshrl.u32 %v367, 7
      %v369 = vsub.s32 7, %v368
      %v370 = vrot.slane %v279, %v369
      %v371 = vlaneseq
      %v372 = vshrl.u32 %v371, 7
      %v373 = vsub.s32 0, %v372
      %v374 = vrot.slane %v280, %v373
      %v375 = vlaneseq
      %v376 = vshrl.u32 %v375, 7
      %v377 = vsub.s32 1, %v376
      %v378 = vrot.slane %v280, %v377
      %v379 = vlaneseq
      %v380 = vshrl.u32 %v379, 7
      %v381 = vsub.s32 2, %v380
      %v382 = vrot.slane %v280, %v381
      %v383 = vlaneseq
      %v384 = vshrl.u32 %v383, 7
      %v385 = vsub.s32 3, %v384
      %v386 = vrot.slane %v280, %v385
      %v387 = vlaneseq
      %v388 = vshrl.u32 %v387, 7
      %v389 = vsub.s32 4, %v388
      %v390 = vrot.slane %v280, %v389
      %v391 = vlaneseq
      %v392 = vshrl.u32 %v391, 7
      %v393 = vsub.s32 5, %v392
      %v394 = vrot.slane %v280, %v393
      %v395 = vlaneseq
      %v396 = vshrl.u32 %v395, 7
      %v397 = vsub.s32 6, %v396
      %v398 = vrot.slane %v280, %v397
      %v399 = vlaneseq
      %v400 = vshrl.u32 %v399, 7
      %v401 = vsub.s32 7, %v400
      %v402 = vrot.slane %v280, %v401
      %v419 = vmul.f32 %v300, %v342
      %v420 = vmul.f32 %v300, %v346
      %v421 = vmul.f32 %v300, %v350
      %v422 = vmul.f32 %v300, %v354
      %v423 = vmul.f32 %v300, %v358
      %v424 = vmul.f32 %v300, %v362
      %v425 = vmul.f32 %v300, %v366
      %v426 = vmul.f32 %v300, %v370
      %v427 = vmul.f32 %v300, %v374
      %v428 = vmul.f32 %v300, %v378
      %v429 = vmul.f32 %v300, %v382
      %v430 = vmul.f32 %v300, %v386
      %v431 = vmul.f32 %v300, %v390
      %v432 = vmul.f32 %v300, %v394
      %v433 = vmul.f32 %v300, %v398
      %v434 = vmul.f32 %v300, %v402
      %v435 = vmul.f32 %v305, %v342
      %v436 = vmul.f32 %v305, %v346
      %v437 = vmul.f32 %v305, %v350
      %v438 = vmul.f32 %v305, %v354
      %v439 = vmul.f32 %v305, %v358
      %v440 = vmul.f32 %v305, %v362
      %v441 = vmul.f32 %v305, %v366
      %v442 = vmul.f32 %v305, %v370
      %v443 = vmul.f32 %v305, %v374
      %v444 = vmul.f32 %v305, %v378
      %v445 = vmul.f32 %v305, %v382
      %v446 = vmul.f32 %v305, %v386
      %v447 = vmul.f32 %v305, %v390
      %v448 = vmul.f32 %v305, %v394
      %v449 = vmul.f32 %v305, %v398
      %v450 = vmul.f32 %v305, %v402
      %v451 = vmul.f32 %v310, %v342
      %v452 = vmul.f32 %v310, %v346
      %v453 = vmul.f32 %v310, %v350
      %v454 = vmul.f32 %v310, %v354
      %v455 = vmul.f32 %v310, %v358
      %v456 = vmul.f32 %v310, %v362
      %v457 = vmul.f32 %v310, %v366
      %v458 = vmul.f32 %v310, %v370
      %v459 = vmul.f32 %v310, %v374
      %v460 = vmul.f32 %v310, %v378
      %v461 = vmul.f32 %v310, %v382
      %v462 = vmul.f32 %v310, %v386
      %v463 = vmul.f32 %v310, %v390
      %v464 = vmul.f32 %v310, %v394
      %v465 = vmul.f32 %v310, %v398
      %v466 = vmul.f32 %v310, %v402
      %v467 = vmul.f32 %v315, %v342
      %v468 = vmul.f32 %v315, %v346
      %v469 = vmul.f32 %v315, %v350
      %v470 = vmul.f32 %v315, %v354
      %v471 = vmul.f32 %v315, %v358
      %v472 = vmul.f32 %v315, %v362
      %v473 = vmul.f32 %v315, %v366
      %v474 = vmul.f32 %v315, %v370
      %v475 = vmul.f32 %v315, %v374
      %v476 = vmul.f32 %v315, %v378
      %v477 = vmul.f32 %v315, %v382
      %v478 = vmul.f32 %v315, %v386
      %v479 = vmul.f32 %v315, %v390
      %v480 = vmul.f32 %v315, %v394
      %v481 = vmul.f32 %v315, %v398
      %v482 = vmul.f32 %v315, %v402
      %v483 = vmul.f32 %v320, %v342
      %v484 = vmul.f32 %v320, %v346
      %v485 = vmul.f32 %v320, %v350
      %v486 = vmul.f32 %v320, %v354
      %v487 = vmul.f32 %v320, %v358
      %v488 = vmul.f32 %v320, %v362
      %v489 = vmul.f32 %v320, %v366
      %v490 = vmul.f32 %v320, %v370
      %v491 = vmul.f32 %v320, %v374
      %v492 = vmul.f32 %v320, %v378
      %v493 = vmul.f32 %v320, %v382
      %v494 = vmul.f32 %v320, %v386
      %v495 = vmul.f32 %v320, %v390
      %v496 = vmul.f32 %v320, %v394
      %v497 = vmul.f32 %v320, %v398
      %v498 = vmul.f32 %v320, %v402
      %v499 = vmul.f32 %v325, %v342
      %v500 = vmul.f32 %v325, %v346
      %v501 = vmul.f32 %v325, %v350
      %v502 = vmul.f32 %v325, %v354
      %v503 = vmul.f32 %v325, %v358
      %v504 = vmul.f32 %v325, %v362
      %v505 = vmul.f32 %v325, %v366
      %v506 = vmul.f32 %v325, %v370
      %v507 = vmul.f32 %v325, %v374
      %v508 = vmul.f32 %v325, %v378
      %v509 = vmul.f32 %v325, %v382
      %v510 = vmul.f32 %v325, %v386
      %v511 = vmul.f32 %v325, %v390
      %v512 = vmul.f32 %v325, %v394
      %v513 = vmul.f32 %v325, %v398
      %v514 = vmul.f32 %v325, %v402
      %v515 = vmul.f32 %v330, %v342
      %v516 = vmul.f32 %v330, %v346
      %v517 = vmul.f32 %v330, %v350
      %v518 = vmul.f32 %v330, %v354
      %v519 = vmul.f32 %v330, %v358
      %v520 = vmul.f32 %v330, %v362
      %v521 = vmul.f32 %v330, %v366
      %v522 = vmul.f32 %v330, %v370
      %v523 = vmul.f32 %v330, %v374
      %v524 = vmul.f32 %v330, %v378
      %v525 = vmul.f32 %v330, %v382
      %v526 = vmul.f32 %v330, %v386
      %v527 = vmul.f32 %v330, %v390
      %v528 = vmul.f32 %v330, %v394
      %v529 = vmul.f32 %v330, %v398
      %v530 = vmul.f32 %v330, %v402
      %v531 = vmul.f32 %v335, %v342
      %v532 = vmul.f32 %v335, %v346
      %v533 = vmul.f32 %v335, %v350
      %v534 = vmul.f32 %v335, %v354
      %v535 = vmul.f32 %v335, %v358
      %v536 = vmul.f32 %v335, %v362
      %v537 = vmul.f32 %v335, %v366
      %v538 = vmul.f32 %v335, %v370
      %v539 = vmul.f32 %v335, %v374
      %v540 = vmul.f32 %v335, %v378
      %v541 = vmul.f32 %v335, %v382
      %v542 = vmul.f32 %v335, %v386
      %v543 = vmul.f32 %v335, %v390
      %v544 = vmul.f32 %v335, %v394
      %v545 = vmul.f32 %v335, %v398
      %v546 = vmul.f32 %v335, %v402
      %548 = vset.pattern.permute.xlu0 0
      %549 = vperm.xlu0 %548, %v289
      %v550 = vpop.permute.xlu0 %549
      %553 = vset.pattern.permute.xlu0 0
      %554 = vperm.xlu0 %553, %v290
      %v555 = vpop.permute.xlu0 %554
      %558 = vset.pattern.permute.xlu0 0
      %559 = vperm.xlu0 %558, %v291
      %v560 = vpop.permute.xlu0 %559
      %563 = vset.pattern.permute.xlu0 0
      %564 = vperm.xlu0 %563, %v292
      %v565 = vpop.permute.xlu0 %564
      %568 = vset.pattern.permute.xlu0 0
      %569 = vperm.xlu0 %568, %v293
      %v570 = vpop.permute.xlu0 %569
      %573 = vset.pattern.permute.xlu0 0
      %574 = vperm.xlu0 %573, %v294
      %v575 = vpop.permute.xlu0 %574
      %578 = vset.pattern.permute.xlu0 0
      %579 = vperm.xlu0 %578, %v295
      %v580 = vpop.permute.xlu0 %579
      %583 = vset.pattern.permute.xlu0 0
      %584 = vperm.xlu0 %583, %v296
      %v585 = vpop.permute.xlu0 %584
      %v587 = vadd.f32 %v419, %v550
      %v588 = vadd.f32 %v420, %v550
      %v589 = vadd.f32 %v421, %v550
      %v590 = vadd.f32 %v422, %v550
      %v591 = vadd.f32 %v423, %v550
      %v592 = vadd.f32 %v424, %v550
      %v593 = vadd.f32 %v425, %v550
      %v594 = vadd.f32 %v426, %v550
      %v595 = vadd.f32 %v427, %v550
      %v596 = vadd.f32 %v428, %v550
      %v597 = vadd.f32 %v429, %v550
      %v598 = vadd.f32 %v430, %v550
      %v599 = vadd.f32 %v431, %v550
      %v600 = vadd.f32 %v432, %v550
      %v601 = vadd.f32 %v433, %v550
      %v602 = vadd.f32 %v434, %v550
      %v603 = vadd.f32 %v435, %v555
      %v604 = vadd.f32 %v436, %v555
      %v605 = vadd.f32 %v437, %v555
      %v606 = vadd.f32 %v438, %v555
      %v607 = vadd.f32 %v439, %v555
      %v608 = vadd.f32 %v440, %v555
      %v609 = vadd.f32 %v441, %v555
      %v610 = vadd.f32 %v442, %v555
      %v611 = vadd.f32 %v443, %v555
      %v612 = vadd.f32 %v444, %v555
      %v613 = vadd.f32 %v445, %v555
      %v614 = vadd.f32 %v446, %v555
      %v615 = vadd.f32 %v447, %v555
      %v616 = vadd.f32 %v448, %v555
      %v617 = vadd.f32 %v449, %v555
      %v618 = vadd.f32 %v450, %v555
      %v619 = vadd.f32 %v451, %v560
      %v620 = vadd.f32 %v452, %v560
      %v621 = vadd.f32 %v453, %v560
      %v622 = vadd.f32 %v454, %v560
      %v623 = vadd.f32 %v455, %v560
      %v624 = vadd.f32 %v456, %v560
      %v625 = vadd.f32 %v457, %v560
      %v626 = vadd.f32 %v458, %v560
      %v627 = vadd.f32 %v459, %v560
      %v628 = vadd.f32 %v460, %v560
      %v629 = vadd.f32 %v461, %v560
      %v630 = vadd.f32 %v462, %v560
      %v631 = vadd.f32 %v463, %v560
      %v632 = vadd.f32 %v464, %v560
      %v633 = vadd.f32 %v465, %v560
      %v634 = vadd.f32 %v466, %v560
      %v635 = vadd.f32 %v467, %v565
      %v636 = vadd.f32 %v468, %v565
      %v637 = vadd.f32 %v469, %v565
      %v638 = vadd.f32 %v470, %v565
      %v639 = vadd.f32 %v471, %v565
      %v640 = vadd.f32 %v472, %v565
      %v641 = vadd.f32 %v473, %v565
      %v642 = vadd.f32 %v474, %v565
      %v643 = vadd.f32 %v475, %v565
      %v644 = vadd.f32 %v476, %v565
      %v645 = vadd.f32 %v477, %v565
      %v646 = vadd.f32 %v478, %v565
      %v647 = vadd.f32 %v479, %v565
      %v648 = vadd.f32 %v480, %v565
      %v649 = vadd.f32 %v481, %v565
      %v650 = vadd.f32 %v482, %v565
      %v651 = vadd.f32 %v483, %v570
      %v652 = vadd.f32 %v484, %v570
      %v653 = vadd.f32 %v485, %v570
      %v654 = vadd.f32 %v486, %v570
      %v655 = vadd.f32 %v487, %v570
      %v656 = vadd.f32 %v488, %v570
      %v657 = vadd.f32 %v489, %v570
      %v658 = vadd.f32 %v490, %v570
      %v659 = vadd.f32 %v491, %v570
      %v660 = vadd.f32 %v492, %v570
      %v661 = vadd.f32 %v493, %v570
      %v662 = vadd.f32 %v494, %v570
      %v663 = vadd.f32 %v495, %v570
      %v664 = vadd.f32 %v496, %v570
      %v665 = vadd.f32 %v497, %v570
      %v666 = vadd.f32 %v498, %v570
      %v667 = vadd.f32 %v499, %v575
      %v668 = vadd.f32 %v500, %v575
      %v669 = vadd.f32 %v501, %v575
      %v670 = vadd.f32 %v502, %v575
      %v671 = vadd.f32 %v503, %v575
      %v672 = vadd.f32 %v504, %v575
      %v673 = vadd.f32 %v505, %v575
      %v674 = vadd.f32 %v506, %v575
      %v675 = vadd.f32 %v507, %v575
      %v676 = vadd.f32 %v508, %v575
      %v677 = vadd.f32 %v509, %v575
      %v678 = vadd.f32 %v510, %v575
      %v679 = vadd.f32 %v511, %v575
      %v680 = vadd.f32 %v512, %v575
      %v681 = vadd.f32 %v513, %v575
      %v682 = vadd.f32 %v514, %v575
      %v683 = vadd.f32 %v515, %v580
      %v684 = vadd.f32 %v516, %v580
      %v685 = vadd.f32 %v517, %v580
      %v686 = vadd.f32 %v518, %v580
      %v687 = vadd.f32 %v519, %v580
      %v688 = vadd.f32 %v520, %v580
      %v689 = vadd.f32 %v521, %v580
      %v690 = vadd.f32 %v522, %v580
      %v691 = vadd.f32 %v523, %v580
      %v692 = vadd.f32 %v524, %v580
      %v693 = vadd.f32 %v525, %v580
      %v694 = vadd.f32 %v526, %v580
      %v695 = vadd.f32 %v527, %v580
      %v696 = vadd.f32 %v528, %v580
      %v697 = vadd.f32 %v529, %v580
      %v698 = vadd.f32 %v530, %v580
      %v699 = vadd.f32 %v531, %v585
      %v700 = vadd.f32 %v532, %v585
      %v701 = vadd.f32 %v533, %v585
      %v702 = vadd.f32 %v534, %v585
      %v703 = vadd.f32 %v535, %v585
      %v704 = vadd.f32 %v536, %v585
      %v705 = vadd.f32 %v537, %v585
      %v706 = vadd.f32 %v538, %v585
      %v707 = vadd.f32 %v539, %v585
      %v708 = vadd.f32 %v540, %v585
      %v709 = vadd.f32 %v541, %v585
      %v710 = vadd.f32 %v542, %v585
      %v711 = vadd.f32 %v543, %v585
      %v712 = vadd.f32 %v544, %v585
      %v713 = vadd.f32 %v545, %v585
      %v714 = vadd.f32 %v546, %v585
      %v715 = vtanh.pop %v587
      %v716 = vtanh.pop %v588
      %v717 = vtanh.pop %v589
      %v718 = vtanh.pop %v590
      %v719 = vtanh.pop %v591
      %v720 = vtanh.pop %v592
      %v721 = vtanh.pop %v593
      %v722 = vtanh.pop %v594
      %v723 = vtanh.pop %v595
      %v724 = vtanh.pop %v596
      %v725 = vtanh.pop %v597
      %v726 = vtanh.pop %v598
      %v727 = vtanh.pop %v599
      %v728 = vtanh.pop %v600
      %v729 = vtanh.pop %v601
      %v730 = vtanh.pop %v602
      %v731 = vtanh.pop %v603
      %v732 = vtanh.pop %v604
      %v733 = vtanh.pop %v605
      %v734 = vtanh.pop %v606
      %v735 = vtanh.pop %v607
      %v736 = vtanh.pop %v608
      %v737 = vtanh.pop %v609
      %v738 = vtanh.pop %v610
      %v739 = vtanh.pop %v611
      %v740 = vtanh.pop %v612
      %v741 = vtanh.pop %v613
      %v742 = vtanh.pop %v614
      %v743 = vtanh.pop %v615
      %v744 = vtanh.pop %v616
      %v745 = vtanh.pop %v617
      %v746 = vtanh.pop %v618
      %v747 = vtanh.pop %v619
      %v748 = vtanh.pop %v620
      %v749 = vtanh.pop %v621
      %v750 = vtanh.pop %v622
      %v751 = vtanh.pop %v623
      %v752 = vtanh.pop %v624
      %v753 = vtanh.pop %v625
      %v754 = vtanh.pop %v626
      %v755 = vtanh.pop %v627
      %v756 = vtanh.pop %v628
      %v757 = vtanh.pop %v629
      %v758 = vtanh.pop %v630
      %v759 = vtanh.pop %v631
      %v760 = vtanh.pop %v632
      %v761 = vtanh.pop %v633
      %v762 = vtanh.pop %v634
      %v763 = vtanh.pop %v635
      %v764 = vtanh.pop %v636
      %v765 = vtanh.pop %v637
      %v766 = vtanh.pop %v638
      %v767 = vtanh.pop %v639
      %v768 = vtanh.pop %v640
      %v769 = vtanh.pop %v641
      %v770 = vtanh.pop %v642
      %v771 = vtanh.pop %v643
      %v772 = vtanh.pop %v644
      %v773 = vtanh.pop %v645
      %v774 = vtanh.pop %v646
      %v775 = vtanh.pop %v647
      %v776 = vtanh.pop %v648
      %v777 = vtanh.pop %v649
      %v778 = vtanh.pop %v650
      %v779 = vtanh.pop %v651
      %v780 = vtanh.pop %v652
      %v781 = vtanh.pop %v653
      %v782 = vtanh.pop %v654
      %v783 = vtanh.pop %v655
      %v784 = vtanh.pop %v656
      %v785 = vtanh.pop %v657
      %v786 = vtanh.pop %v658
      %v787 = vtanh.pop %v659
      %v788 = vtanh.pop %v660
      %v789 = vtanh.pop %v661
      %v790 = vtanh.pop %v662
      %v791 = vtanh.pop %v663
      %v792 = vtanh.pop %v664
      %v793 = vtanh.pop %v665
      %v794 = vtanh.pop %v666
      %v795 = vtanh.pop %v667
      %v796 = vtanh.pop %v668
      %v797 = vtanh.pop %v669
      %v798 = vtanh.pop %v670
      %v799 = vtanh.pop %v671
      %v800 = vtanh.pop %v672
      %v801 = vtanh.pop %v673
      %v802 = vtanh.pop %v674
      %v803 = vtanh.pop %v675
      %v804 = vtanh.pop %v676
      %v805 = vtanh.pop %v677
      %v806 = vtanh.pop %v678
      %v807 = vtanh.pop %v679
      %v808 = vtanh.pop %v680
      %v809 = vtanh.pop %v681
      %v810 = vtanh.pop %v682
      %v811 = vtanh.pop %v683
      %v812 = vtanh.pop %v684
      %v813 = vtanh.pop %v685
      %v814 = vtanh.pop %v686
      %v815 = vtanh.pop %v687
      %v816 = vtanh.pop %v688
      %v817 = vtanh.pop %v689
      %v818 = vtanh.pop %v690
      %v819 = vtanh.pop %v691
      %v820 = vtanh.pop %v692
      %v821 = vtanh.pop %v693
      %v822 = vtanh.pop %v694
      %v823 = vtanh.pop %v695
      %v824 = vtanh.pop %v696
      %v825 = vtanh.pop %v697
      %v826 = vtanh.pop %v698
      %v827 = vtanh.pop %v699
      %v828 = vtanh.pop %v700
      %v829 = vtanh.pop %v701
      %v830 = vtanh.pop %v702
      %v831 = vtanh.pop %v703
      %v832 = vtanh.pop %v704
      %v833 = vtanh.pop %v705
      %v834 = vtanh.pop %v706
      %v835 = vtanh.pop %v707
      %v836 = vtanh.pop %v708
      %v837 = vtanh.pop %v709
      %v838 = vtanh.pop %v710
      %v839 = vtanh.pop %v711
      %v840 = vtanh.pop %v712
      %v841 = vtanh.pop %v713
      %v842 = vtanh.pop %v714
      %v843 = vld [vmem:[%s2] sm:$0xff]
      %v844 = vld [vmem:[%s2 + $0x8] sm:$0xff]
      %v845 = vld [vmem:[%s2 + $0x10] sm:$0xff]
      %v846 = vld [vmem:[%s2 + $0x18] sm:$0xff]
      %v847 = vld [vmem:[%s2 + $0x20] sm:$0xff]
      %v848 = vld [vmem:[%s2 + $0x28] sm:$0xff]
      %v849 = vld [vmem:[%s2 + $0x30] sm:$0xff]
      %v850 = vld [vmem:[%s2 + $0x38] sm:$0xff]
      %v851 = vld [vmem:[%s5] sm:$0xff]
      %v852 = vld [vmem:[%s5 + $0x8] sm:$0xff]
      %v853 = vld [vmem:[%s5 + $0x10] sm:$0xff]
      %v854 = vld [vmem:[%s5 + $0x18] sm:$0xff]
      %v855 = vld [vmem:[%s5 + $0x20] sm:$0xff]
      %v856 = vld [vmem:[%s5 + $0x28] sm:$0xff]
      %v857 = vld [vmem:[%s5 + $0x30] sm:$0xff]
      %v858 = vld [vmem:[%s5 + $0x38] sm:$0xff]
      %860 = vset.pattern.permute.xlu0 0
      %861 = vperm.xlu0 %860, %v851
      %v862 = vpop.permute.xlu0 %861
      %865 = vset.pattern.permute.xlu0 0
      %866 = vperm.xlu0 %865, %v852
      %v867 = vpop.permute.xlu0 %866
      %870 = vset.pattern.permute.xlu0 0
      %871 = vperm.xlu0 %870, %v853
      %v872 = vpop.permute.xlu0 %871
      %875 = vset.pattern.permute.xlu0 0
      %876 = vperm.xlu0 %875, %v854
      %v877 = vpop.permute.xlu0 %876
      %880 = vset.pattern.permute.xlu0 0
      %881 = vperm.xlu0 %880, %v855
      %v882 = vpop.permute.xlu0 %881
      %885 = vset.pattern.permute.xlu0 0
      %886 = vperm.xlu0 %885, %v856
      %v887 = vpop.permute.xlu0 %886
      %890 = vset.pattern.permute.xlu0 0
      %891 = vperm.xlu0 %890, %v857
      %v892 = vpop.permute.xlu0 %891
      %895 = vset.pattern.permute.xlu0 0
      %896 = vperm.xlu0 %895, %v858
      %v897 = vpop.permute.xlu0 %896
      %vm899 = vcmask 523264
      %v901 = vsel %vm899, %v843, 0
      %v904 = vsel %vm899, %v844, 0
      %v907 = vsel %vm899, %v845, 0
      %v910 = vsel %vm899, %v846, 0
      %v913 = vsel %vm899, %v847, 0
      %v916 = vsel %vm899, %v848, 0
      %v919 = vsel %vm899, %v849, 0
      %v922 = vsel %vm899, %v850, 0
      %924 = vmatprep.subr.mxu0 %v716
      %925 = vmatpush1.msra.mxu0 %v715
      %926 = vmatprep.subr.mxu0 %v732
      %927 = vmatpush1.msra.mxu0 %v731
      %928 = vmatprep.subr.mxu0 %v748
      %929 = vmatpush1.msra.mxu0 %v747
      %930 = vmatprep.subr.mxu0 %v764
      %931 = vmatpush1.msra.mxu0 %v763
      %932 = vmatprep.subr.mxu0 %v780
      %933 = vmatpush1.msra.mxu0 %v779
      %934 = vmatprep.subr.mxu0 %v796
      %935 = vmatpush1.msra.mxu0 %v795
      %936 = vmatprep.subr.mxu0 %v812
      %937 = vmatpush1.msra.mxu0 %v811
      %938 = vmatprep.subr.mxu0 %v828
      %939 = vmatpush1.msra.mxu0 %v827
      %940 = vmatprep.subr.mxu0 0.0
      %941 = vmatpush1.msra.mxu0 0.0
      %942 = vmatprep.subr.mxu0 0.0
      %943 = vmatpush1.msra.mxu0 0.0
      %944 = vmatprep.subr.mxu0 0.0
      %945 = vmatpush1.msra.mxu0 0.0
      %946 = vmatprep.subr.mxu0 0.0
      %947 = vmatpush1.msra.mxu0 0.0
      %948 = vmatprep.subr.mxu0 0.0
      %949 = vmatpush1.msra.mxu0 0.0
      %950 = vmatprep.subr.mxu0 0.0
      %951 = vmatpush1.msra.mxu0 0.0
      %952 = vmatprep.subr.mxu0 0.0
      %953 = vmatpush1.msra.mxu0 0.0
      %954 = vmatprep.subr.mxu0 0.0
      %955 = vmatpush1.msra.mxu0 0.0
      %956 = vmatprep.subr.mxu0 0.0
      %957 = vmatpush1.msra.mxu0 0.0
      %958 = vmatprep.subr.mxu0 0.0
      %959 = vmatpush1.msra.mxu0 0.0
      %960 = vmatprep.subr.mxu0 0.0
      %961 = vmatpush1.msra.mxu0 0.0
      %962 = vmatprep.subr.mxu0 0.0
      %963 = vmatpush1.msra.mxu0 0.0
      %964 = vmatprep.subr.mxu0 0.0
      %965 = vmatpush1.msra.mxu0 0.0
      %966 = vmatprep.subr.mxu0 0.0
      %967 = vmatpush1.msra.mxu0 0.0
      %968 = vmatprep.subr.mxu0 0.0
      %969 = vmatpush1.msra.mxu0 0.0
      %970 = vmatprep.subr.mxu0 0.0
      %971 = vmatpush1.msra.mxu0 0.0
      %972 = vmatprep.subr.mxu0 0.0
      %973 = vmatpush1.msra.mxu0 0.0
      %974 = vmatprep.subr.mxu0 0.0
      %975 = vmatpush1.msra.mxu0 0.0
      %976 = vmatprep.subr.mxu0 0.0
      %977 = vmatpush1.msra.mxu0 0.0
      %978 = vmatprep.subr.mxu0 0.0
      %979 = vmatpush1.msra.mxu0 0.0
      %980 = vmatprep.subr.mxu0 0.0
      %981 = vmatpush1.msra.mxu0 0.0
      %982 = vmatprep.subr.mxu0 0.0
      %983 = vmatpush1.msra.mxu0 0.0
      %984 = vmatprep.subr.mxu0 0.0
      %985 = vmatpush1.msra.mxu0 0.0
      %986 = vmatprep.subr.mxu0 0.0
      %987 = vmatpush1.msra.mxu0 0.0
      %988 = vmatprep.mubr.f32.mxu0 0.0
      %989 = vmatmul.mubr.f32.gmra.mrb[0].mxu0 %v901
      %v990 = vpop.f32.mrb[0].mxu0
      %v991 = vadd.f32 %v862, %v990
      %v992 = vpop.f32.mrb[0].mxu0
      %v993 = vadd.f32 %v862, %v992
      %994 = vmatprep.mubr.f32.mxu0 0.0
      %995 = vmatmul.mubr.f32.gmra.mrb[0].mxu0 %v904
      %v996 = vpop.f32.mrb[0].mxu0
      %v997 = vadd.f32 %v867, %v996
      %v998 = vpop.f32.mrb[0].mxu0
      %v999 = vadd.f32 %v867, %v998
      %1000 = vmatprep.mubr.f32.mxu0 0.0
      %1001 = vmatmul.mubr.f32.gmra.mrb[0].mxu0 %v907
      %v1002 = vpop.f32.mrb[0].mxu0
      %v1003 = vadd.f32 %v872, %v1002
      %v1004 = vpop.f32.mrb[0].mxu0
      %v1005 = vadd.f32 %v872, %v1004
      %1006 = vmatprep.mubr.f32.mxu0 0.0
      %1007 = vmatmul.mubr.f32.gmra.mrb[0].mxu0 %v910
      %v1008 = vpop.f32.mrb[0].mxu0
      %v1009 = vadd.f32 %v877, %v1008
      %v1010 = vpop.f32.mrb[0].mxu0
      %v1011 = vadd.f32 %v877, %v1010
      %1012 = vmatprep.mubr.f32.mxu0 0.0
      %1013 = vmatmul.mubr.f32.gmra.mrb[0].mxu0 %v913
      %v1014 = vpop.f32.mrb[0].mxu0
      %v1015 = vadd.f32 %v882, %v1014
      %v1016 = vpop.f32.mrb[0].mxu0
      %v1017 = vadd.f32 %v882, %v1016
      %1018 = vmatprep.mubr.f32.mxu0 0.0
      %1019 = vmatmul.mubr.f32.gmra.mrb[0].mxu0 %v916
      %v1020 = vpop.f32.mrb[0].mxu0
      %v1021 = vadd.f32 %v887, %v1020
      %v1022 = vpop.f32.mrb[0].mxu0
      %v1023 = vadd.f32 %v887, %v1022
      %1024 = vmatprep.mubr.f32.mxu0 0.0
      %1025 = vmatmul.mubr.f32.gmra.mrb[0].mxu0 %v919
      %v1026 = vpop.f32.mrb[0].mxu0
      %v1027 = vadd.f32 %v892, %v1026
      %v1028 = vpop.f32.mrb[0].mxu0
      %v1029 = vadd.f32 %v892, %v1028
      %1030 = vmatprep.mubr.f32.mxu0 0.0
      %1031 = vmatmul.mubr.f32.gmra.mrb[0].mxu0 %v922
      %v1032 = vpop.f32.mrb[0].mxu0
      %v1033 = vadd.f32 %v897, %v1032
      %v1034 = vpop.f32.mrb[0].mxu0
      %v1035 = vadd.f32 %v897, %v1034
      %1036 = vdwg.mxu0
      %1037 = vmatprep.subr.mxu0 %v718
      %1038 = vmatpush1.msra.mxu0 %v717
      %1039 = vmatprep.subr.mxu0 %v734
      %1040 = vmatpush1.msra.mxu0 %v733
      %1041 = vmatprep.subr.mxu0 %v750
      %1042 = vmatpush1.msra.mxu0 %v749
      %1043 = vmatprep.subr.mxu0 %v766
      %1044 = vmatpush1.msra.mxu0 %v765
      %1045 = vmatprep.subr.mxu0 %v782
      %1046 = vmatpush1.msra.mxu0 %v781
      %1047 = vmatprep.subr.mxu0 %v798
      %1048 = vmatpush1.msra.mxu0 %v797
      %1049 = vmatprep.subr.mxu0 %v814
      %1050 = vmatpush1.msra.mxu0 %v813
      %1051 = vmatprep.subr.mxu0 %v830
      %1052 = vmatpush1.msra.mxu0 %v829
      %1053 = vmatprep.subr.mxu0 0.0
      %1054 = vmatpush1.msra.mxu0 0.0
      %1055 = vmatprep.subr.mxu0 0.0
      %1056 = vmatpush1.msra.mxu0 0.0
      %1057 = vmatprep.subr.mxu0 0.0
      %1058 = vmatpush1.msra.mxu0 0.0
      %1059 = vmatprep.subr.mxu0 0.0
      %1060 = vmatpush1.msra.mxu0 0.0
      %1061 = vmatprep.subr.mxu0 0.0
      %1062 = vmatpush1.msra.mxu0 0.0
      %1063 = vmatprep.subr.mxu0 0.0
      %1064 = vmatpush1.msra.mxu0 0.0
      %1065 = vmatprep.subr.mxu0 0.0
      %1066 = vmatpush1.msra.mxu0 0.0
      %1067 = vmatprep.subr.mxu0 0.0
      %1068 = vmatpush1.msra.mxu0 0.0
      %1069 = vmatprep.subr.mxu0 0.0
      %1070 = vmatpush1.msra.mxu0 0.0
      %1071 = vmatprep.subr.mxu0 0.0
      %1072 = vmatpush1.msra.mxu0 0.0
      %1073 = vmatprep.subr.mxu0 0.0
      %1074 = vmatpush1.msra.mxu0 0.0
      %1075 = vmatprep.subr.mxu0 0.0
      %1076 = vmatpush1.msra.mxu0 0.0
      %1077 = vmatprep.subr.mxu0 0.0
      %1078 = vmatpush1.msra.mxu0 0.0
      %1079 = vmatprep.subr.mxu0 0.0
      %1080 = vmatpush1.msra.mxu0 0.0
      %1081 = vmatprep.subr.mxu0 0.0
      %1082 = vmatpush1.msra.mxu0 0.0
      %1083 = vmatprep.subr.mxu0 0.0
      %1084 = vmatpush1.msra.mxu0 0.0
      %1085 = vmatprep.subr.mxu0 0.0
      %1086 = vmatpush1.msra.mxu0 0.0
      %1087 = vmatprep.subr.mxu0 0.0
      %1088 = vmatpush1.msra.mxu0 0.0
      %1089 = vmatprep.subr.mxu0 0.0
      %1090 = vmatpush1.msra.mxu0 0.0
      %1091 = vmatprep.subr.mxu0 0.0
      %1092 = vmatpush1.msra.mxu0 0.0
      %1093 = vmatprep.subr.mxu0 0.0
      %1094 = vmatpush1.msra.mxu0 0.0
      %1095 = vmatprep.subr.mxu0 0.0
      %1096 = vmatpush1.msra.mxu0 0.0
      %1097 = vmatprep.subr.mxu0 0.0
      %1098 = vmatpush1.msra.mxu0 0.0
      %1099 = vmatprep.subr.mxu0 0.0
      %1100 = vmatpush1.msra.mxu0 0.0
      %1101 = vmatprep.mubr.f32.mxu0 0.0
      %1102 = vmatmul.mubr.f32.gmra.mrb[0].mxu0 %v901
      %v1103 = vpop.f32.mrb[0].mxu0
      %v1104 = vadd.f32 %v862, %v1103
      %v1105 = vpop.f32.mrb[0].mxu0
      %v1106 = vadd.f32 %v862, %v1105
      %1107 = vmatprep.mubr.f32.mxu0 0.0
      %1108 = vmatmul.mubr.f32.gmra.mrb[0].mxu0 %v904
      %v1109 = vpop.f32.mrb[0].mxu0
      %v1110 = vadd.f32 %v867, %v1109
      %v1111 = vpop.f32.mrb[0].mxu0
      %v1112 = vadd.f32 %v867, %v1111
      %1113 = vmatprep.mubr.f32.mxu0 0.0
      %1114 = vmatmul.mubr.f32.gmra.mrb[0].mxu0 %v907
      %v1115 = vpop.f32.mrb[0].mxu0
      %v1116 = vadd.f32 %v872, %v1115
      %v1117 = vpop.f32.mrb[0].mxu0
      %v1118 = vadd.f32 %v872, %v1117
      %1119 = vmatprep.mubr.f32.mxu0 0.0
      %1120 = vmatmul.mubr.f32.gmra.mrb[0].mxu0 %v910
      %v1121 = vpop.f32.mrb[0].mxu0
      %v1122 = vadd.f32 %v877, %v1121
      %v1123 = vpop.f32.mrb[0].mxu0
      %v1124 = vadd.f32 %v877, %v1123
      %1125 = vmatprep.mubr.f32.mxu0 0.0
      %1126 = vmatmul.mubr.f32.gmra.mrb[0].mxu0 %v913
      %v1127 = vpop.f32.mrb[0].mxu0
      %v1128 = vadd.f32 %v882, %v1127
      %v1129 = vpop.f32.mrb[0].mxu0
      %v1130 = vadd.f32 %v882, %v1129
      %1131 = vmatprep.mubr.f32.mxu0 0.0
      %1132 = vmatmul.mubr.f32.gmra.mrb[0].mxu0 %v916
      %v1133 = vpop.f32.mrb[0].mxu0
      %v1134 = vadd.f32 %v887, %v1133
      %v1135 = vpop.f32.mrb[0].mxu0
      %v1136 = vadd.f32 %v887, %v1135
      %1137 = vmatprep.mubr.f32.mxu0 0.0
      %1138 = vmatmul.mubr.f32.gmra.mrb[0].mxu0 %v919
      %v1139 = vpop.f32.mrb[0].mxu0
      %v1140 = vadd.f32 %v892, %v1139
      %v1141 = vpop.f32.mrb[0].mxu0
      %v1142 = vadd.f32 %v892, %v1141
      %1143 = vmatprep.mubr.f32.mxu0 0.0
      %1144 = vmatmul.mubr.f32.gmra.mrb[0].mxu0 %v922
      %v1145 = vpop.f32.mrb[0].mxu0
      %v1146 = vadd.f32 %v897, %v1145
      %v1147 = vpop.f32.mrb[0].mxu0
      %v1148 = vadd.f32 %v897, %v1147
      %1149 = vdwg.mxu0
      %1150 = vmatprep.subr.mxu0 %v720
      %1151 = vmatpush1.msra.mxu0 %v719
      %1152 = vmatprep.subr.mxu0 %v736
      %1153 = vmatpush1.msra.mxu0 %v735
      %1154 = vmatprep.subr.mxu0 %v752
      %1155 = vmatpush1.msra.mxu0 %v751
      %1156 = vmatprep.subr.mxu0 %v768
      %1157 = vmatpush1.msra.mxu0 %v767
      %1158 = vmatprep.subr.mxu0 %v784
      %1159 = vmatpush1.msra.mxu0 %v783
      %1160 = vmatprep.subr.mxu0 %v800
      %1161 = vmatpush1.msra.mxu0 %v799
      %1162 = vmatprep.subr.mxu0 %v816
      %1163 = vmatpush1.msra.mxu0 %v815
      %1164 = vmatprep.subr.mxu0 %v832
      %1165 = vmatpush1.msra.mxu0 %v831
      %1166 = vmatprep.subr.mxu0 0.0
      %1167 = vmatpush1.msra.mxu0 0.0
      %1168 = vmatprep.subr.mxu0 0.0
      %1169 = vmatpush1.msra.mxu0 0.0
      %1170 = vmatprep.subr.mxu0 0.0
      %1171 = vmatpush1.msra.mxu0 0.0
      %1172 = vmatprep.subr.mxu0 0.0
      %1173 = vmatpush1.msra.mxu0 0.0
      %1174 = vmatprep.subr.mxu0 0.0
      %1175 = vmatpush1.msra.mxu0 0.0
      %1176 = vmatprep.subr.mxu0 0.0
      %1177 = vmatpush1.msra.mxu0 0.0
      %1178 = vmatprep.subr.mxu0 0.0
      %1179 = vmatpush1.msra.mxu0 0.0
      %1180 = vmatprep.subr.mxu0 0.0
      %1181 = vmatpush1.msra.mxu0 0.0
      %1182 = vmatprep.subr.mxu0 0.0
      %1183 = vmatpush1.msra.mxu0 0.0
      %1184 = vmatprep.subr.mxu0 0.0
      %1185 = vmatpush1.msra.mxu0 0.0
      %1186 = vmatprep.subr.mxu0 0.0
      %1187 = vmatpush1.msra.mxu0 0.0
      %1188 = vmatprep.subr.mxu0 0.0
      %1189 = vmatpush1.msra.mxu0 0.0
      %1190 = vmatprep.subr.mxu0 0.0
      %1191 = vmatpush1.msra.mxu0 0.0
      %1192 = vmatprep.subr.mxu0 0.0
      %1193 = vmatpush1.msra.mxu0 0.0
      %1194 = vmatprep.subr.mxu0 0.0
      %1195 = vmatpush1.msra.mxu0 0.0
      %1196 = vmatprep.subr.mxu0 0.0
      %1197 = vmatpush1.msra.mxu0 0.0
      %1198 = vmatprep.subr.mxu0 0.0
      %1199 = vmatpush1.msra.mxu0 0.0
      %1200 = vmatprep.subr.mxu0 0.0
      %1201 = vmatpush1.msra.mxu0 0.0
      %1202 = vmatprep.subr.mxu0 0.0
      %1203 = vmatpush1.msra.mxu0 0.0
      %1204 = vmatprep.subr.mxu0 0.0
      %1205 = vmatpush1.msra.mxu0 0.0
      %1206 = vmatprep.subr.mxu0 0.0
      %1207 = vmatpush1.msra.mxu0 0.0
      %1208 = vmatprep.subr.mxu0 0.0
      %1209 = vmatpush1.msra.mxu0 0.0
      %1210 = vmatprep.subr.mxu0 0.0
      %1211 = vmatpush1.msra.mxu0 0.0
      %1212 = vmatprep.subr.mxu0 0.0
      %1213 = vmatpush1.msra.mxu0 0.0
      %1214 = vmatprep.mubr.f32.mxu0 0.0
      %1215 = vmatmul.mubr.f32.gmra.mrb[0].mxu0 %v901
      %v1216 = vpop.f32.mrb[0].mxu0
      %v1217 = vadd.f32 %v862, %v1216
      %v1218 = vpop.f32.mrb[0].mxu0
      %v1219 = vadd.f32 %v862, %v1218
      %1220 = vmatprep.mubr.f32.mxu0 0.0
      %1221 = vmatmul.mubr.f32.gmra.mrb[0].mxu0 %v904
      %v1222 = vpop.f32.mrb[0].mxu0
      %v1223 = vadd.f32 %v867, %v1222
      %v1224 = vpop.f32.mrb[0].mxu0
      %v1225 = vadd.f32 %v867, %v1224
      %1226 = vmatprep.mubr.f32.mxu0 0.0
      %1227 = vmatmul.mubr.f32.gmra.mrb[0].mxu0 %v907
      %v1228 = vpop.f32.mrb[0].mxu0
      %v1229 = vadd.f32 %v872, %v1228
      %v1230 = vpop.f32.mrb[0].mxu0
      %v1231 = vadd.f32 %v872, %v1230
      %1232 = vmatprep.mubr.f32.mxu0 0.0
      %1233 = vmatmul.mubr.f32.gmra.mrb[0].mxu0 %v910
      %v1234 = vpop.f32.mrb[0].mxu0
      %v1235 = vadd.f32 %v877, %v1234
      %v1236 = vpop.f32.mrb[0].mxu0
      %v1237 = vadd.f32 %v877, %v1236
      %1238 = vmatprep.mubr.f32.mxu0 0.0
      %1239 = vmatmul.mubr.f32.gmra.mrb[0].mxu0 %v913
      %v1240 = vpop.f32.mrb[0].mxu0
      %v1241 = vadd.f32 %v882, %v1240
      %v1242 = vpop.f32.mrb[0].mxu0
      %v1243 = vadd.f32 %v882, %v1242
      %1244 = vmatprep.mubr.f32.mxu0 0.0
      %1245 = vmatmul.mubr.f32.gmra.mrb[0].mxu0 %v916
      %v1246 = vpop.f32.mrb[0].mxu0
      %v1247 = vadd.f32 %v887, %v1246
      %v1248 = vpop.f32.mrb[0].mxu0
      %v1249 = vadd.f32 %v887, %v1248
      %1250 = vmatprep.mubr.f32.mxu0 0.0
      %1251 = vmatmul.mubr.f32.gmra.mrb[0].mxu0 %v919
      %v1252 = vpop.f32.mrb[0].mxu0
      %v1253 = vadd.f32 %v892, %v1252
      %v1254 = vpop.f32.mrb[0].mxu0
      %v1255 = vadd.f32 %v892, %v1254
      %1256 = vmatprep.mubr.f32.mxu0 0.0
      %1257 = vmatmul.mubr.f32.gmra.mrb[0].mxu0 %v922
      %v1258 = vpop.f32.mrb[0].mxu0
      %v1259 = vadd.f32 %v897, %v1258
      %v1260 = vpop.f32.mrb[0].mxu0
      %v1261 = vadd.f32 %v897, %v1260
      %1262 = vdwg.mxu0
      %1263 = vmatprep.subr.mxu0 %v722
      %1264 = vmatpush1.msra.mxu0 %v721
      %1265 = vmatprep.subr.mxu0 %v738
      %1266 = vmatpush1.msra.mxu0 %v737
      %1267 = vmatprep.subr.mxu0 %v754
      %1268 = vmatpush1.msra.mxu0 %v753
      %1269 = vmatprep.subr.mxu0 %v770
      %1270 = vmatpush1.msra.mxu0 %v769
      %1271 = vmatprep.subr.mxu0 %v786
      %1272 = vmatpush1.msra.mxu0 %v785
      %1273 = vmatprep.subr.mxu0 %v802
      %1274 = vmatpush1.msra.mxu0 %v801
      %1275 = vmatprep.subr.mxu0 %v818
      %1276 = vmatpush1.msra.mxu0 %v817
      %1277 = vmatprep.subr.mxu0 %v834
      %1278 = vmatpush1.msra.mxu0 %v833
      %1279 = vmatprep.subr.mxu0 0.0
      %1280 = vmatpush1.msra.mxu0 0.0
      %1281 = vmatprep.subr.mxu0 0.0
      %1282 = vmatpush1.msra.mxu0 0.0
      %1283 = vmatprep.subr.mxu0 0.0
      %1284 = vmatpush1.msra.mxu0 0.0
      %1285 = vmatprep.subr.mxu0 0.0
      %1286 = vmatpush1.msra.mxu0 0.0
      %1287 = vmatprep.subr.mxu0 0.0
      %1288 = vmatpush1.msra.mxu0 0.0
      %1289 = vmatprep.subr.mxu0 0.0
      %1290 = vmatpush1.msra.mxu0 0.0
      %1291 = vmatprep.subr.mxu0 0.0
      %1292 = vmatpush1.msra.mxu0 0.0
      %1293 = vmatprep.subr.mxu0 0.0
      %1294 = vmatpush1.msra.mxu0 0.0
      %1295 = vmatprep.subr.mxu0 0.0
      %1296 = vmatpush1.msra.mxu0 0.0
      %1297 = vmatprep.subr.mxu0 0.0
      %1298 = vmatpush1.msra.mxu0 0.0
      %1299 = vmatprep.subr.mxu0 0.0
      %1300 = vmatpush1.msra.mxu0 0.0
      %1301 = vmatprep.subr.mxu0 0.0
      %1302 = vmatpush1.msra.mxu0 0.0
      %1303 = vmatprep.subr.mxu0 0.0
      %1304 = vmatpush1.msra.mxu0 0.0
      %1305 = vmatprep.subr.mxu0 0.0
      %1306 = vmatpush1.msra.mxu0 0.0
      %1307 = vmatprep.subr.mxu0 0.0
      %1308 = vmatpush1.msra.mxu0 0.0
      %1309 = vmatprep.subr.mxu0 0.0
      %1310 = vmatpush1.msra.mxu0 0.0
      %1311 = vmatprep.subr.mxu0 0.0
      %1312 = vmatpush1.msra.mxu0 0.0
      %1313 = vmatprep.subr.mxu0 0.0
      %1314 = vmatpush1.msra.mxu0 0.0
      %1315 = vmatprep.subr.mxu0 0.0
      %1316 = vmatpush1.msra.mxu0 0.0
      %1317 = vmatprep.subr.mxu0 0.0
      %1318 = vmatpush1.msra.mxu0 0.0
      %1319 = vmatprep.subr.mxu0 0.0
      %1320 = vmatpush1.msra.mxu0 0.0
      %1321 = vmatprep.subr.mxu0 0.0
      %1322 = vmatpush1.msra.mxu0 0.0
      %1323 = vmatprep.subr.mxu0 0.0
      %1324 = vmatpush1.msra.mxu0 0.0
      %1325 = vmatprep.subr.mxu0 0.0
      %1326 = vmatpush1.msra.mxu0 0.0
      %1327 = vmatprep.mubr.f32.mxu0 0.0
      %1328 = vmatmul.mubr.f32.gmra.mrb[0].mxu0 %v901
      %v1329 = vpop.f32.mrb[0].mxu0
      %v1330 = vadd.f32 %v862, %v1329
      %v1331 = vpop.f32.mrb[0].mxu0
      %v1332 = vadd.f32 %v862, %v1331
      %1333 = vmatprep.mubr.f32.mxu0 0.0
      %1334 = vmatmul.mubr.f32.gmra.mrb[0].mxu0 %v904
      %v1335 = vpop.f32.mrb[0].mxu0
      %v1336 = vadd.f32 %v867, %v1335
      %v1337 = vpop.f32.mrb[0].mxu0
      %v1338 = vadd.f32 %v867, %v1337
      %1339 = vmatprep.mubr.f32.mxu0 0.0
      %1340 = vmatmul.mubr.f32.gmra.mrb[0].mxu0 %v907
      %v1341 = vpop.f32.mrb[0].mxu0
      %v1342 = vadd.f32 %v872, %v1341
      %v1343 = vpop.f32.mrb[0].mxu0
      %v1344 = vadd.f32 %v872, %v1343
      %1345 = vmatprep.mubr.f32.mxu0 0.0
      %1346 = vmatmul.mubr.f32.gmra.mrb[0].mxu0 %v910
      %v1347 = vpop.f32.mrb[0].mxu0
      %v1348 = vadd.f32 %v877, %v1347
      %v1349 = vpop.f32.mrb[0].mxu0
      %v1350 = vadd.f32 %v877, %v1349
      %1351 = vmatprep.mubr.f32.mxu0 0.0
      %1352 = vmatmul.mubr.f32.gmra.mrb[0].mxu0 %v913
      %v1353 = vpop.f32.mrb[0].mxu0
      %v1354 = vadd.f32 %v882, %v1353
      %v1355 = vpop.f32.mrb[0].mxu0
      %v1356 = vadd.f32 %v882, %v1355
      %1357 = vmatprep.mubr.f32.mxu0 0.0
      %1358 = vmatmul.mubr.f32.gmra.mrb[0].mxu0 %v916
      %v1359 = vpop.f32.mrb[0].mxu0
      %v1360 = vadd.f32 %v887, %v1359
      %v1361 = vpop.f32.mrb[0].mxu0
      %v1362 = vadd.f32 %v887, %v1361
      %1363 = vmatprep.mubr.f32.mxu0 0.0
      %1364 = vmatmul.mubr.f32.gmra.mrb[0].mxu0 %v919
      %v1365 = vpop.f32.mrb[0].mxu0
      %v1366 = vadd.f32 %v892, %v1365
      %v1367 = vpop.f32.mrb[0].mxu0
      %v1368 = vadd.f32 %v892, %v1367
      %1369 = vmatprep.mubr.f32.mxu0 0.0
      %1370 = vmatmul.mubr.f32.gmra.mrb[0].mxu0 %v922
      %v1371 = vpop.f32.mrb[0].mxu0
      %v1372 = vadd.f32 %v897, %v1371
      %v1373 = vpop.f32.mrb[0].mxu0
      %v1374 = vadd.f32 %v897, %v1373
      %1375 = vdwg.mxu0
      %1376 = vmatprep.subr.mxu0 %v724
      %1377 = vmatpush1.msra.mxu0 %v723
      %1378 = vmatprep.subr.mxu0 %v740
      %1379 = vmatpush1.msra.mxu0 %v739
      %1380 = vmatprep.subr.mxu0 %v756
      %1381 = vmatpush1.msra.mxu0 %v755
      %1382 = vmatprep.subr.mxu0 %v772
      %1383 = vmatpush1.msra.mxu0 %v771
      %1384 = vmatprep.subr.mxu0 %v788
      %1385 = vmatpush1.msra.mxu0 %v787
      %1386 = vmatprep.subr.mxu0 %v804
      %1387 = vmatpush1.msra.mxu0 %v803
      %1388 = vmatprep.subr.mxu0 %v820
      %1389 = vmatpush1.msra.mxu0 %v819
      %1390 = vmatprep.subr.mxu0 %v836
      %1391 = vmatpush1.msra.mxu0 %v835
      %1392 = vmatprep.subr.mxu0 0.0
      %1393 = vmatpush1.msra.mxu0 0.0
      %1394 = vmatprep.subr.mxu0 0.0
      %1395 = vmatpush1.msra.mxu0 0.0
      %1396 = vmatprep.subr.mxu0 0.0
      %1397 = vmatpush1.msra.mxu0 0.0
      %1398 = vmatprep.subr.mxu0 0.0
      %1399 = vmatpush1.msra.mxu0 0.0
      %1400 = vmatprep.subr.mxu0 0.0
      %1401 = vmatpush1.msra.mxu0 0.0
      %1402 = vmatprep.subr.mxu0 0.0
      %1403 = vmatpush1.msra.mxu0 0.0
      %1404 = vmatprep.subr.mxu0 0.0
      %1405 = vmatpush1.msra.mxu0 0.0
      %1406 = vmatprep.subr.mxu0 0.0
      %1407 = vmatpush1.msra.mxu0 0.0
      %1408 = vmatprep.subr.mxu0 0.0
      %1409 = vmatpush1.msra.mxu0 0.0
      %1410 = vmatprep.subr.mxu0 0.0
      %1411 = vmatpush1.msra.mxu0 0.0
      %1412 = vmatprep.subr.mxu0 0.0
      %1413 = vmatpush1.msra.mxu0 0.0
      %1414 = vmatprep.subr.mxu0 0.0
      %1415 = vmatpush1.msra.mxu0 0.0
      %1416 = vmatprep.subr.mxu0 0.0
      %1417 = vmatpush1.msra.mxu0 0.0
      %1418 = vmatprep.subr.mxu0 0.0
      %1419 = vmatpush1.msra.mxu0 0.0
      %1420 = vmatprep.subr.mxu0 0.0
      %1421 = vmatpush1.msra.mxu0 0.0
      %1422 = vmatprep.subr.mxu0 0.0
      %1423 = vmatpush1.msra.mxu0 0.0
      %1424 = vmatprep.subr.mxu0 0.0
      %1425 = vmatpush1.msra.mxu0 0.0
      %1426 = vmatprep.subr.mxu0 0.0
      %1427 = vmatpush1.msra.mxu0 0.0
      %1428 = vmatprep.subr.mxu0 0.0
      %1429 = vmatpush1.msra.mxu0 0.0
      %1430 = vmatprep.subr.mxu0 0.0
      %1431 = vmatpush1.msra.mxu0 0.0
      %1432 = vmatprep.subr.mxu0 0.0
      %1433 = vmatpush1.msra.mxu0 0.0
      %1434 = vmatprep.subr.mxu0 0.0
      %1435 = vmatpush1.msra.mxu0 0.0
      %1436 = vmatprep.subr.mxu0 0.0
      %1437 = vmatpush1.msra.mxu0 0.0
      %1438 = vmatprep.subr.mxu0 0.0
      %1439 = vmatpush1.msra.mxu0 0.0
      %1440 = vmatprep.mubr.f32.mxu0 0.0
      %1441 = vmatmul.mubr.f32.gmra.mrb[0].mxu0 %v901
      %v1442 = vpop.f32.mrb[0].mxu0
      %v1443 = vadd.f32 %v862, %v1442
      %v1444 = vpop.f32.mrb[0].mxu0
      %v1445 = vadd.f32 %v862, %v1444
      %1446 = vmatprep.mubr.f32.mxu0 0.0
      %1447 = vmatmul.mubr.f32.gmra.mrb[0].mxu0 %v904
      %v1448 = vpop.f32.mrb[0].mxu0
      %v1449 = vadd.f32 %v867, %v1448
      %v1450 = vpop.f32.mrb[0].mxu0
      %v1451 = vadd.f32 %v867, %v1450
      %1452 = vmatprep.mubr.f32.mxu0 0.0
      %1453 = vmatmul.mubr.f32.gmra.mrb[0].mxu0 %v907
      %v1454 = vpop.f32.mrb[0].mxu0
      %v1455 = vadd.f32 %v872, %v1454
      %v1456 = vpop.f32.mrb[0].mxu0
      %v1457 = vadd.f32 %v872, %v1456
      %1458 = vmatprep.mubr.f32.mxu0 0.0
      %1459 = vmatmul.mubr.f32.gmra.mrb[0].mxu0 %v910
      %v1460 = vpop.f32.mrb[0].mxu0
      %v1461 = vadd.f32 %v877, %v1460
      %v1462 = vpop.f32.mrb[0].mxu0
      %v1463 = vadd.f32 %v877, %v1462
      %1464 = vmatprep.mubr.f32.mxu0 0.0
      %1465 = vmatmul.mubr.f32.gmra.mrb[0].mxu0 %v913
      %v1466 = vpop.f32.mrb[0].mxu0
      %v1467 = vadd.f32 %v882, %v1466
      %v1468 = vpop.f32.mrb[0].mxu0
      %v1469 = vadd.f32 %v882, %v1468
      %1470 = vmatprep.mubr.f32.mxu0 0.0
      %1471 = vmatmul.mubr.f32.gmra.mrb[0].mxu0 %v916
      %v1472 = vpop.f32.mrb[0].mxu0
      %v1473 = vadd.f32 %v887, %v1472
      %v1474 = vpop.f32.mrb[0].mxu0
      %v1475 = vadd.f32 %v887, %v1474
      %1476 = vmatprep.mubr.f32.mxu0 0.0
      %1477 = vmatmul.mubr.f32.gmra.mrb[0].mxu0 %v919
      %v1478 = vpop.f32.mrb[0].mxu0
      %v1479 = vadd.f32 %v892, %v1478
      %v1480 = vpop.f32.mrb[0].mxu0
      %v1481 = vadd.f32 %v892, %v1480
      %1482 = vmatprep.mubr.f32.mxu0 0.0
      %1483 = vmatmul.mubr.f32.gmra.mrb[0].mxu0 %v922
      %v1484 = vpop.f32.mrb[0].mxu0
      %v1485 = vadd.f32 %v897, %v1484
      %v1486 = vpop.f32.mrb[0].mxu0
      %v1487 = vadd.f32 %v897, %v1486
      %1488 = vdwg.mxu0
      %1489 = vmatprep.subr.mxu0 %v726
      %1490 = vmatpush1.msra.mxu0 %v725
      %1491 = vmatprep.subr.mxu0 %v742
      %1492 = vmatpush1.msra.mxu0 %v741
      %1493 = vmatprep.subr.mxu0 %v758
      %1494 = vmatpush1.msra.mxu0 %v757
      %1495 = vmatprep.subr.mxu0 %v774
      %1496 = vmatpush1.msra.mxu0 %v773
      %1497 = vmatprep.subr.mxu0 %v790
      %1498 = vmatpush1.msra.mxu0 %v789
      %1499 = vmatprep.subr.mxu0 %v806
      %1500 = vmatpush1.msra.mxu0 %v805
      %1501 = vmatprep.subr.mxu0 %v822
      %1502 = vmatpush1.msra.mxu0 %v821
      %1503 = vmatprep.subr.mxu0 %v838
      %1504 = vmatpush1.msra.mxu0 %v837
      %1505 = vmatprep.subr.mxu0 0.0
      %1506 = vmatpush1.msra.mxu0 0.0
      %1507 = vmatprep.subr.mxu0 0.0
      %1508 = vmatpush1.msra.mxu0 0.0
      %1509 = vmatprep.subr.mxu0 0.0
      %1510 = vmatpush1.msra.mxu0 0.0
      %1511 = vmatprep.subr.mxu0 0.0
      %1512 = vmatpush1.msra.mxu0 0.0
      %1513 = vmatprep.subr.mxu0 0.0
      %1514 = vmatpush1.msra.mxu0 0.0
      %1515 = vmatprep.subr.mxu0 0.0
      %1516 = vmatpush1.msra.mxu0 0.0
      %1517 = vmatprep.subr.mxu0 0.0
      %1518 = vmatpush1.msra.mxu0 0.0
      %1519 = vmatprep.subr.mxu0 0.0
      %1520 = vmatpush1.msra.mxu0 0.0
      %1521 = vmatprep.subr.mxu0 0.0
      %1522 = vmatpush1.msra.mxu0 0.0
      %1523 = vmatprep.subr.mxu0 0.0
      %1524 = vmatpush1.msra.mxu0 0.0
      %1525 = vmatprep.subr.mxu0 0.0
      %1526 = vmatpush1.msra.mxu0 0.0
      %1527 = vmatprep.subr.mxu0 0.0
      %1528 = vmatpush1.msra.mxu0 0.0
      %1529 = vmatprep.subr.mxu0 0.0
      %1530 = vmatpush1.msra.mxu0 0.0
      %1531 = vmatprep.subr.mxu0 0.0
      %1532 = vmatpush1.msra.mxu0 0.0
      %1533 = vmatprep.subr.mxu0 0.0
      %1534 = vmatpush1.msra.mxu0 0.0
      %1535 = vmatprep.subr.mxu0 0.0
      %1536 = vmatpush1.msra.mxu0 0.0
      %1537 = vmatprep.subr.mxu0 0.0
      %1538 = vmatpush1.msra.mxu0 0.0
      %1539 = vmatprep.subr.mxu0 0.0
      %1540 = vmatpush1.msra.mxu0 0.0
      %1541 = vmatprep.subr.mxu0 0.0
      %1542 = vmatpush1.msra.mxu0 0.0
      %1543 = vmatprep.subr.mxu0 0.0
      %1544 = vmatpush1.msra.mxu0 0.0
      %1545 = vmatprep.subr.mxu0 0.0
      %1546 = vmatpush1.msra.mxu0 0.0
      %1547 = vmatprep.subr.mxu0 0.0
      %1548 = vmatpush1.msra.mxu0 0.0
      %1549 = vmatprep.subr.mxu0 0.0
      %1550 = vmatpush1.msra.mxu0 0.0
      %1551 = vmatprep.subr.mxu0 0.0
      %1552 = vmatpush1.msra.mxu0 0.0
      %1553 = vmatprep.mubr.f32.mxu0 0.0
      %1554 = vmatmul.mubr.f32.gmra.mrb[0].mxu0 %v901
      %v1555 = vpop.f32.mrb[0].mxu0
      %v1556 = vadd.f32 %v862, %v1555
      %v1557 = vpop.f32.mrb[0].mxu0
      %v1558 = vadd.f32 %v862, %v1557
      %1559 = vmatprep.mubr.f32.mxu0 0.0
      %1560 = vmatmul.mubr.f32.gmra.mrb[0].mxu0 %v904
      %v1561 = vpop.f32.mrb[0].mxu0
      %v1562 = vadd.f32 %v867, %v1561
      %v1563 = vpop.f32.mrb[0].mxu0
      %v1564 = vadd.f32 %v867, %v1563
      %1565 = vmatprep.mubr.f32.mxu0 0.0
      %1566 = vmatmul.mubr.f32.gmra.mrb[0].mxu0 %v907
      %v1567 = vpop.f32.mrb[0].mxu0
      %v1568 = vadd.f32 %v872, %v1567
      %v1569 = vpop.f32.mrb[0].mxu0
      %v1570 = vadd.f32 %v872, %v1569
      %1571 = vmatprep.mubr.f32.mxu0 0.0
      %1572 = vmatmul.mubr.f32.gmra.mrb[0].mxu0 %v910
      %v1573 = vpop.f32.mrb[0].mxu0
      %v1574 = vadd.f32 %v877, %v1573
      %v1575 = vpop.f32.mrb[0].mxu0
      %v1576 = vadd.f32 %v877, %v1575
      %1577 = vmatprep.mubr.f32.mxu0 0.0
      %1578 = vmatmul.mubr.f32.gmra.mrb[0].mxu0 %v913
      %v1579 = vpop.f32.mrb[0].mxu0
      %v1580 = vadd.f32 %v882, %v1579
      %v1581 = vpop.f32.mrb[0].mxu0
      %v1582 = vadd.f32 %v882, %v1581
      %1583 = vmatprep.mubr.f32.mxu0 0.0
      %1584 = vmatmul.mubr.f32.gmra.mrb[0].mxu0 %v916
      %v1585 = vpop.f32.mrb[0].mxu0
      %v1586 = vadd.f32 %v887, %v1585
      %v1587 = vpop.f32.mrb[0].mxu0
      %v1588 = vadd.f32 %v887, %v1587
      %1589 = vmatprep.mubr.f32.mxu0 0.0
      %1590 = vmatmul.mubr.f32.gmra.mrb[0].mxu0 %v919
      %v1591 = vpop.f32.mrb[0].mxu0
      %v1592 = vadd.f32 %v892, %v1591
      %v1593 = vpop.f32.mrb[0].mxu0
      %v1594 = vadd.f32 %v892, %v1593
      %1595 = vmatprep.mubr.f32.mxu0 0.0
      %1596 = vmatmul.mubr.f32.gmra.mrb[0].mxu0 %v922
      %v1597 = vpop.f32.mrb[0].mxu0
      %v1598 = vadd.f32 %v897, %v1597
      %v1599 = vpop.f32.mrb[0].mxu0
      %v1600 = vadd.f32 %v897, %v1599
      %1601 = vdwg.mxu0
      %1602 = vmatprep.subr.mxu0 %v728
      %1603 = vmatpush1.msra.mxu0 %v727
      %1604 = vmatprep.subr.mxu0 %v744
      %1605 = vmatpush1.msra.mxu0 %v743
      %1606 = vmatprep.subr.mxu0 %v760
      %1607 = vmatpush1.msra.mxu0 %v759
      %1608 = vmatprep.subr.mxu0 %v776
      %1609 = vmatpush1.msra.mxu0 %v775
      %1610 = vmatprep.subr.mxu0 %v792
      %1611 = vmatpush1.msra.mxu0 %v791
      %1612 = vmatprep.subr.mxu0 %v808
      %1613 = vmatpush1.msra.mxu0 %v807
      %1614 = vmatprep.subr.mxu0 %v824
      %1615 = vmatpush1.msra.mxu0 %v823
      %1616 = vmatprep.subr.mxu0 %v840
      %1617 = vmatpush1.msra.mxu0 %v839
      %1618 = vmatprep.subr.mxu0 0.0
      %1619 = vmatpush1.msra.mxu0 0.0
      %1620 = vmatprep.subr.mxu0 0.0
      %1621 = vmatpush1.msra.mxu0 0.0
      %1622 = vmatprep.subr.mxu0 0.0
      %1623 = vmatpush1.msra.mxu0 0.0
      %1624 = vmatprep.subr.mxu0 0.0
      %1625 = vmatpush1.msra.mxu0 0.0
      %1626 = vmatprep.subr.mxu0 0.0
      %1627 = vmatpush1.msra.mxu0 0.0
      %1628 = vmatprep.subr.mxu0 0.0
      %1629 = vmatpush1.msra.mxu0 0.0
      %1630 = vmatprep.subr.mxu0 0.0
      %1631 = vmatpush1.msra.mxu0 0.0
      %1632 = vmatprep.subr.mxu0 0.0
      %1633 = vmatpush1.msra.mxu0 0.0
      %1634 = vmatprep.subr.mxu0 0.0
      %1635 = vmatpush1.msra.mxu0 0.0
      %1636 = vmatprep.subr.mxu0 0.0
      %1637 = vmatpush1.msra.mxu0 0.0
      %1638 = vmatprep.subr.mxu0 0.0
      %1639 = vmatpush1.msra.mxu0 0.0
      %1640 = vmatprep.subr.mxu0 0.0
      %1641 = vmatpush1.msra.mxu0 0.0
      %1642 = vmatprep.subr.mxu0 0.0
      %1643 = vmatpush1.msra.mxu0 0.0
      %1644 = vmatprep.subr.mxu0 0.0
      %1645 = vmatpush1.msra.mxu0 0.0
      %1646 = vmatprep.subr.mxu0 0.0
      %1647 = vmatpush1.msra.mxu0 0.0
      %1648 = vmatprep.subr.mxu0 0.0
      %1649 = vmatpush1.msra.mxu0 0.0
      %1650 = vmatprep.subr.mxu0 0.0
      %1651 = vmatpush1.msra.mxu0 0.0
      %1652 = vmatprep.subr.mxu0 0.0
      %1653 = vmatpush1.msra.mxu0 0.0
      %1654 = vmatprep.subr.mxu0 0.0
      %1655 = vmatpush1.msra.mxu0 0.0
      %1656 = vmatprep.subr.mxu0 0.0
      %1657 = vmatpush1.msra.mxu0 0.0
      %1658 = vmatprep.subr.mxu0 0.0
      %1659 = vmatpush1.msra.mxu0 0.0
      %1660 = vmatprep.subr.mxu0 0.0
      %1661 = vmatpush1.msra.mxu0 0.0
      %1662 = vmatprep.subr.mxu0 0.0
      %1663 = vmatpush1.msra.mxu0 0.0
      %1664 = vmatprep.subr.mxu0 0.0
      %1665 = vmatpush1.msra.mxu0 0.0
      %1666 = vmatprep.mubr.f32.mxu0 0.0
      %1667 = vmatmul.mubr.f32.gmra.mrb[0].mxu0 %v901
      %v1668 = vpop.f32.mrb[0].mxu0
      %v1669 = vadd.f32 %v862, %v1668
      %v1670 = vpop.f32.mrb[0].mxu0
      %v1671 = vadd.f32 %v862, %v1670
      %1672 = vmatprep.mubr.f32.mxu0 0.0
      %1673 = vmatmul.mubr.f32.gmra.mrb[0].mxu0 %v904
      %v1674 = vpop.f32.mrb[0].mxu0
      %v1675 = vadd.f32 %v867, %v1674
      %v1676 = vpop.f32.mrb[0].mxu0
      %v1677 = vadd.f32 %v867, %v1676
      %1678 = vmatprep.mubr.f32.mxu0 0.0
      %1679 = vmatmul.mubr.f32.gmra.mrb[0].mxu0 %v907
      %v1680 = vpop.f32.mrb[0].mxu0
      %v1681 = vadd.f32 %v872, %v1680
      %v1682 = vpop.f32.mrb[0].mxu0
      %v1683 = vadd.f32 %v872, %v1682
      %1684 = vmatprep.mubr.f32.mxu0 0.0
      %1685 = vmatmul.mubr.f32.gmra.mrb[0].mxu0 %v910
      %v1686 = vpop.f32.mrb[0].mxu0
      %v1687 = vadd.f32 %v877, %v1686
      %v1688 = vpop.f32.mrb[0].mxu0
      %v1689 = vadd.f32 %v877, %v1688
      %1690 = vmatprep.mubr.f32.mxu0 0.0
      %1691 = vmatmul.mubr.f32.gmra.mrb[0].mxu0 %v913
      %v1692 = vpop.f32.mrb[0].mxu0
      %v1693 = vadd.f32 %v882, %v1692
      %v1694 = vpop.f32.mrb[0].mxu0
      %v1695 = vadd.f32 %v882, %v1694
      %1696 = vmatprep.mubr.f32.mxu0 0.0
      %1697 = vmatmul.mubr.f32.gmra.mrb[0].mxu0 %v916
      %v1698 = vpop.f32.mrb[0].mxu0
      %v1699 = vadd.f32 %v887, %v1698
      %v1700 = vpop.f32.mrb[0].mxu0
      %v1701 = vadd.f32 %v887, %v1700
      %1702 = vmatprep.mubr.f32.mxu0 0.0
      %1703 = vmatmul.mubr.f32.gmra.mrb[0].mxu0 %v919
      %v1704 = vpop.f32.mrb[0].mxu0
      %v1705 = vadd.f32 %v892, %v1704
      %v1706 = vpop.f32.mrb[0].mxu0
      %v1707 = vadd.f32 %v892, %v1706
      %1708 = vmatprep.mubr.f32.mxu0 0.0
      %1709 = vmatmul.mubr.f32.gmra.mrb[0].mxu0 %v922
      %v1710 = vpop.f32.mrb[0].mxu0
      %v1711 = vadd.f32 %v897, %v1710
      %v1712 = vpop.f32.mrb[0].mxu0
      %v1713 = vadd.f32 %v897, %v1712
      %1714 = vdwg.mxu0
      %1715 = vmatprep.subr.mxu0 %v730
      %1716 = vmatpush1.msra.mxu0 %v729
      %1717 = vmatprep.subr.mxu0 %v746
      %1718 = vmatpush1.msra.mxu0 %v745
      %1719 = vmatprep.subr.mxu0 %v762
      %1720 = vmatpush1.msra.mxu0 %v761
      %1721 = vmatprep.subr.mxu0 %v778
      %1722 = vmatpush1.msra.mxu0 %v777
      %1723 = vmatprep.subr.mxu0 %v794
      %1724 = vmatpush1.msra.mxu0 %v793
      %1725 = vmatprep.subr.mxu0 %v810
      %1726 = vmatpush1.msra.mxu0 %v809
      %1727 = vmatprep.subr.mxu0 %v826
      %1728 = vmatpush1.msra.mxu0 %v825
      %1729 = vmatprep.subr.mxu0 %v842
      %1730 = vmatpush1.msra.mxu0 %v841
      %1731 = vmatprep.subr.mxu0 0.0
      %1732 = vmatpush1.msra.mxu0 0.0
      %1733 = vmatprep.subr.mxu0 0.0
      %1734 = vmatpush1.msra.mxu0 0.0
      %1735 = vmatprep.subr.mxu0 0.0
      %1736 = vmatpush1.msra.mxu0 0.0
      %1737 = vmatprep.subr.mxu0 0.0
      %1738 = vmatpush1.msra.mxu0 0.0
      %1739 = vmatprep.subr.mxu0 0.0
      %1740 = vmatpush1.msra.mxu0 0.0
      %1741 = vmatprep.subr.mxu0 0.0
      %1742 = vmatpush1.msra.mxu0 0.0
      %1743 = vmatprep.subr.mxu0 0.0
      %1744 = vmatpush1.msra.mxu0 0.0
      %1745 = vmatprep.subr.mxu0 0.0
      %1746 = vmatpush1.msra.mxu0 0.0
      %1747 = vmatprep.subr.mxu0 0.0
      %1748 = vmatpush1.msra.mxu0 0.0
      %1749 = vmatprep.subr.mxu0 0.0
      %1750 = vmatpush1.msra.mxu0 0.0
      %1751 = vmatprep.subr.mxu0 0.0
      %1752 = vmatpush1.msra.mxu0 0.0
      %1753 = vmatprep.subr.mxu0 0.0
      %1754 = vmatpush1.msra.mxu0 0.0
      %1755 = vmatprep.subr.mxu0 0.0
      %1756 = vmatpush1.msra.mxu0 0.0
      %1757 = vmatprep.subr.mxu0 0.0
      %1758 = vmatpush1.msra.mxu0 0.0
      %1759 = vmatprep.subr.mxu0 0.0
      %1760 = vmatpush1.msra.mxu0 0.0
      %1761 = vmatprep.subr.mxu0 0.0
      %1762 = vmatpush1.msra.mxu0 0.0
      %1763 = vmatprep.subr.mxu0 0.0
      %1764 = vmatpush1.msra.mxu0 0.0
      %1765 = vmatprep.subr.mxu0 0.0
      %1766 = vmatpush1.msra.mxu0 0.0
      %1767 = vmatprep.subr.mxu0 0.0
      %1768 = vmatpush1.msra.mxu0 0.0
      %1769 = vmatprep.subr.mxu0 0.0
      %1770 = vmatpush1.msra.mxu0 0.0
      %1771 = vmatprep.subr.mxu0 0.0
      %1772 = vmatpush1.msra.mxu0 0.0
      %1773 = vmatprep.subr.mxu0 0.0
      %1774 = vmatpush1.msra.mxu0 0.0
      %1775 = vmatprep.subr.mxu0 0.0
      %1776 = vmatpush1.msra.mxu0 0.0
      %1777 = vmatprep.subr.mxu0 0.0
      %1778 = vmatpush1.msra.mxu0 0.0
      %1779 = vmatprep.mubr.f32.mxu0 0.0
      %1780 = vmatmul.mubr.f32.gmra.mrb[0].mxu0 %v901
      %v1781 = vpop.f32.mrb[0].mxu0
      %v1782 = vadd.f32 %v862, %v1781
      %v1783 = vpop.f32.mrb[0].mxu0
      %v1784 = vadd.f32 %v862, %v1783
      %1785 = vmatprep.mubr.f32.mxu0 0.0
      %1786 = vmatmul.mubr.f32.gmra.mrb[0].mxu0 %v904
      %v1787 = vpop.f32.mrb[0].mxu0
      %v1788 = vadd.f32 %v867, %v1787
      %v1789 = vpop.f32.mrb[0].mxu0
      %v1790 = vadd.f32 %v867, %v1789
      %1791 = vmatprep.mubr.f32.mxu0 0.0
      %1792 = vmatmul.mubr.f32.gmra.mrb[0].mxu0 %v907
      %v1793 = vpop.f32.mrb[0].mxu0
      %v1794 = vadd.f32 %v872, %v1793
      %v1795 = vpop.f32.mrb[0].mxu0
      %v1796 = vadd.f32 %v872, %v1795
      %1797 = vmatprep.mubr.f32.mxu0 0.0
      %1798 = vmatmul.mubr.f32.gmra.mrb[0].mxu0 %v910
      %v1799 = vpop.f32.mrb[0].mxu0
      %v1800 = vadd.f32 %v877, %v1799
      %v1801 = vpop.f32.mrb[0].mxu0
      %v1802 = vadd.f32 %v877, %v1801
      %1803 = vmatprep.mubr.f32.mxu0 0.0
      %1804 = vmatmul.mubr.f32.gmra.mrb[0].mxu0 %v913
      %v1805 = vpop.f32.mrb[0].mxu0
      %v1806 = vadd.f32 %v882, %v1805
      %v1807 = vpop.f32.mrb[0].mxu0
      %v1808 = vadd.f32 %v882, %v1807
      %1809 = vmatprep.mubr.f32.mxu0 0.0
      %1810 = vmatmul.mubr.f32.gmra.mrb[0].mxu0 %v916
      %v1811 = vpop.f32.mrb[0].mxu0
      %v1812 = vadd.f32 %v887, %v1811
      %v1813 = vpop.f32.mrb[0].mxu0
      %v1814 = vadd.f32 %v887, %v1813
      %1815 = vmatprep.mubr.f32.mxu0 0.0
      %1816 = vmatmul.mubr.f32.gmra.mrb[0].mxu0 %v919
      %v1817 = vpop.f32.mrb[0].mxu0
      %v1818 = vadd.f32 %v892, %v1817
      %v1819 = vpop.f32.mrb[0].mxu0
      %v1820 = vadd.f32 %v892, %v1819
      %1821 = vmatprep.mubr.f32.mxu0 0.0
      %1822 = vmatmul.mubr.f32.gmra.mrb[0].mxu0 %v922
      %v1823 = vpop.f32.mrb[0].mxu0
      %v1824 = vadd.f32 %v897, %v1823
      %v1825 = vpop.f32.mrb[0].mxu0
      %v1826 = vadd.f32 %v897, %v1825
      %1827 = vdwg.mxu0
      %v1828 = vtanh.pop %v991
      %v1829 = vtanh.pop %v993
      %v1830 = vtanh.pop %v1104
      %v1831 = vtanh.pop %v1106
      %v1832 = vtanh.pop %v1217
      %v1833 = vtanh.pop %v1219
      %v1834 = vtanh.pop %v1330
      %v1835 = vtanh.pop %v1332
      %v1836 = vtanh.pop %v1443
      %v1837 = vtanh.pop %v1445
      %v1838 = vtanh.pop %v1556
      %v1839 = vtanh.pop %v1558
      %v1840 = vtanh.pop %v1669
      %v1841 = vtanh.pop %v1671
      %v1842 = vtanh.pop %v1782
      %v1843 = vtanh.pop %v1784
      %v1844 = vtanh.pop %v997
      %v1845 = vtanh.pop %v999
      %v1846 = vtanh.pop %v1110
      %v1847 = vtanh.pop %v1112
      %v1848 = vtanh.pop %v1223
      %v1849 = vtanh.pop %v1225
      %v1850 = vtanh.pop %v1336
      %v1851 = vtanh.pop %v1338
      %v1852 = vtanh.pop %v1449
      %v1853 = vtanh.pop %v1451
      %v1854 = vtanh.pop %v1562
      %v1855 = vtanh.pop %v1564
      %v1856 = vtanh.pop %v1675
      %v1857 = vtanh.pop %v1677
      %v1858 = vtanh.pop %v1788
      %v1859 = vtanh.pop %v1790
      %v1860 = vtanh.pop %v1003
      %v1861 = vtanh.pop %v1005
      %v1862 = vtanh.pop %v1116
      %v1863 = vtanh.pop %v1118
      %v1864 = vtanh.pop %v1229
      %v1865 = vtanh.pop %v1231
      %v1866 = vtanh.pop %v1342
      %v1867 = vtanh.pop %v1344
      %v1868 = vtanh.pop %v1455
      %v1869 = vtanh.pop %v1457
      %v1870 = vtanh.pop %v1568
      %v1871 = vtanh.pop %v1570
      %v1872 = vtanh.pop %v1681
      %v1873 = vtanh.pop %v1683
      %v1874 = vtanh.pop %v1794
      %v1875 = vtanh.pop %v1796
      %v1876 = vtanh.pop %v1009
      %v1877 = vtanh.pop %v1011
      %v1878 = vtanh.pop %v1122
      %v1879 = vtanh.pop %v1124
      %v1880 = vtanh.pop %v1235
      %v1881 = vtanh.pop %v1237
      %v1882 = vtanh.pop %v1348
      %v1883 = vtanh.pop %v1350
      %v1884 = vtanh.pop %v1461
      %v1885 = vtanh.pop %v1463
      %v1886 = vtanh.pop %v1574
      %v1887 = vtanh.pop %v1576
      %v1888 = vtanh.pop %v1687
      %v1889 = vtanh.pop %v1689
      %v1890 = vtanh.pop %v1800
      %v1891 = vtanh.pop %v1802
      %v1892 = vtanh.pop %v1015
      %v1893 = vtanh.pop %v1017
      %v1894 = vtanh.pop %v1128
      %v1895 = vtanh.pop %v1130
      %v1896 = vtanh.pop %v1241
      %v1897 = vtanh.pop %v1243
      %v1898 = vtanh.pop %v1354
      %v1899 = vtanh.pop %v1356
      %v1900 = vtanh.pop %v1467
      %v1901 = vtanh.pop %v1469
      %v1902 = vtanh.pop %v1580
      %v1903 = vtanh.pop %v1582
      %v1904 = vtanh.pop %v1693
      %v1905 = vtanh.pop %v1695
      %v1906 = vtanh.pop %v1806
      %v1907 = vtanh.pop %v1808
      %v1908 = vtanh.pop %v1021
      %v1909 = vtanh.pop %v1023
      %v1910 = vtanh.pop %v1134
      %v1911 = vtanh.pop %v1136
      %v1912 = vtanh.pop %v1247
      %v1913 = vtanh.pop %v1249
      %v1914 = vtanh.pop %v1360
      %v1915 = vtanh.pop %v1362
      %v1916 = vtanh.pop %v1473
      %v1917 = vtanh.pop %v1475
      %v1918 = vtanh.pop %v1586
      %v1919 = vtanh.pop %v1588
      %v1920 = vtanh.pop %v1699
      %v1921 = vtanh.pop %v1701
      %v1922 = vtanh.pop %v1812
      %v1923 = vtanh.pop %v1814
      %v1924 = vtanh.pop %v1027
      %v1925 = vtanh.pop %v1029
      %v1926 = vtanh.pop %v1140
      %v1927 = vtanh.pop %v1142
      %v1928 = vtanh.pop %v1253
      %v1929 = vtanh.pop %v1255
      %v1930 = vtanh.pop %v1366
      %v1931 = vtanh.pop %v1368
      %v1932 = vtanh.pop %v1479
      %v1933 = vtanh.pop %v1481
      %v1934 = vtanh.pop %v1592
      %v1935 = vtanh.pop %v1594
      %v1936 = vtanh.pop %v1705
      %v1937 = vtanh.pop %v1707
      %v1938 = vtanh.pop %v1818
      %v1939 = vtanh.pop %v1820
      %v1940 = vtanh.pop %v1033
      %v1941 = vtanh.pop %v1035
      %v1942 = vtanh.pop %v1146
      %v1943 = vtanh.pop %v1148
      %v1944 = vtanh.pop %v1259
      %v1945 = vtanh.pop %v1261
      %v1946 = vtanh.pop %v1372
      %v1947 = vtanh.pop %v1374
      %v1948 = vtanh.pop %v1485
      %v1949 = vtanh.pop %v1487
      %v1950 = vtanh.pop %v1598
      %v1951 = vtanh.pop %v1600
      %v1952 = vtanh.pop %v1711
      %v1953 = vtanh.pop %v1713
      %v1954 = vtanh.pop %v1824
      %v1955 = vtanh.pop %v1826
      %v1956 = vld [vmem:[%s3] sm:$0xff]
      %v1957 = vld [vmem:[%s3 + $0x8] sm:$0xff]
      %v1958 = vld [vmem:[%s3 + $0x10] sm:$0xff]
      %v1959 = vld [vmem:[%s3 + $0x18] sm:$0xff]
      %v1960 = vld [vmem:[%s3 + $0x20] sm:$0xff]
      %v1961 = vld [vmem:[%s3 + $0x28] sm:$0xff]
      %v1962 = vld [vmem:[%s3 + $0x30] sm:$0xff]
      %v1963 = vld [vmem:[%s3 + $0x38] sm:$0xff]
      %v1964 = vld [vmem:[%s6] sm:$0x3]
      %1966 = vset.pattern.permute.xlu0 0
      %1967 = vperm.xlu0 %1966, %v1956
      %v1968 = vpop.permute.xlu0 %1967
      %1971 = vset.pattern.permute.xlu0 0
      %1972 = vperm.xlu0 %1971, %v1957
      %v1973 = vpop.permute.xlu0 %1972
      %1976 = vset.pattern.permute.xlu0 0
      %1977 = vperm.xlu0 %1976, %v1958
      %v1978 = vpop.permute.xlu0 %1977
      %1981 = vset.pattern.permute.xlu0 0
      %1982 = vperm.xlu0 %1981, %v1959
      %v1983 = vpop.permute.xlu0 %1982
      %1986 = vset.pattern.permute.xlu0 0
      %1987 = vperm.xlu0 %1986, %v1960
      %v1988 = vpop.permute.xlu0 %1987
      %1991 = vset.pattern.permute.xlu0 0
      %1992 = vperm.xlu0 %1991, %v1961
      %v1993 = vpop.permute.xlu0 %1992
      %1996 = vset.pattern.permute.xlu0 0
      %1997 = vperm.xlu0 %1996, %v1962
      %v1998 = vpop.permute.xlu0 %1997
      %2001 = vset.pattern.permute.xlu0 0
      %2002 = vperm.xlu0 %2001, %v1963
      %v2003 = vpop.permute.xlu0 %2002
      %v2005 = vmul.f32 %v1968, %v1828
      %v2006 = vmul.f32 %v1968, %v1829
      %v2007 = vmul.f32 %v1968, %v1830
      %v2008 = vmul.f32 %v1968, %v1831
      %v2009 = vmul.f32 %v1968, %v1832
      %v2010 = vmul.f32 %v1968, %v1833
      %v2011 = vmul.f32 %v1968, %v1834
      %v2012 = vmul.f32 %v1968, %v1835
      %v2013 = vmul.f32 %v1968, %v1836
      %v2014 = vmul.f32 %v1968, %v1837
      %v2015 = vmul.f32 %v1968, %v1838
      %v2016 = vmul.f32 %v1968, %v1839
      %v2017 = vmul.f32 %v1968, %v1840
      %v2018 = vmul.f32 %v1968, %v1841
      %v2019 = vmul.f32 %v1968, %v1842
      %v2020 = vmul.f32 %v1968, %v1843
      %v2021 = vmul.f32 %v1973, %v1844
      %v2022 = vmul.f32 %v1973, %v1845
      %v2023 = vmul.f32 %v1973, %v1846
      %v2024 = vmul.f32 %v1973, %v1847
      %v2025 = vmul.f32 %v1973, %v1848
      %v2026 = vmul.f32 %v1973, %v1849
      %v2027 = vmul.f32 %v1973, %v1850
      %v2028 = vmul.f32 %v1973, %v1851
      %v2029 = vmul.f32 %v1973, %v1852
      %v2030 = vmul.f32 %v1973, %v1853
      %v2031 = vmul.f32 %v1973, %v1854
      %v2032 = vmul.f32 %v1973, %v1855
      %v2033 = vmul.f32 %v1973, %v1856
      %v2034 = vmul.f32 %v1973, %v1857
      %v2035 = vmul.f32 %v1973, %v1858
      %v2036 = vmul.f32 %v1973, %v1859
      %v2037 = vmul.f32 %v1978, %v1860
      %v2038 = vmul.f32 %v1978, %v1861
      %v2039 = vmul.f32 %v1978, %v1862
      %v2040 = vmul.f32 %v1978, %v1863
      %v2041 = vmul.f32 %v1978, %v1864
      %v2042 = vmul.f32 %v1978, %v1865
      %v2043 = vmul.f32 %v1978, %v1866
      %v2044 = vmul.f32 %v1978, %v1867
      %v2045 = vmul.f32 %v1978, %v1868
      %v2046 = vmul.f32 %v1978, %v1869
      %v2047 = vmul.f32 %v1978, %v1870
      %v2048 = vmul.f32 %v1978, %v1871
      %v2049 = vmul.f32 %v1978, %v1872
      %v2050 = vmul.f32 %v1978, %v1873
      %v2051 = vmul.f32 %v1978, %v1874
      %v2052 = vmul.f32 %v1978, %v1875
      %v2053 = vmul.f32 %v1983, %v1876
      %v2054 = vmul.f32 %v1983, %v1877
      %v2055 = vmul.f32 %v1983, %v1878
      %v2056 = vmul.f32 %v1983, %v1879
      %v2057 = vmul.f32 %v1983, %v1880
      %v2058 = vmul.f32 %v1983, %v1881
      %v2059 = vmul.f32 %v1983, %v1882
      %v2060 = vmul.f32 %v1983, %v1883
      %v2061 = vmul.f32 %v1983, %v1884
      %v2062 = vmul.f32 %v1983, %v1885
      %v2063 = vmul.f32 %v1983, %v1886
      %v2064 = vmul.f32 %v1983, %v1887
      %v2065 = vmul.f32 %v1983, %v1888
      %v2066 = vmul.f32 %v1983, %v1889
      %v2067 = vmul.f32 %v1983, %v1890
      %v2068 = vmul.f32 %v1983, %v1891
      %v2069 = vmul.f32 %v1988, %v1892
      %v2070 = vmul.f32 %v1988, %v1893
      %v2071 = vmul.f32 %v1988, %v1894
      %v2072 = vmul.f32 %v1988, %v1895
      %v2073 = vmul.f32 %v1988, %v1896
      %v2074 = vmul.f32 %v1988, %v1897
      %v2075 = vmul.f32 %v1988, %v1898
      %v2076 = vmul.f32 %v1988, %v1899
      %v2077 = vmul.f32 %v1988, %v1900
      %v2078 = vmul.f32 %v1988, %v1901
      %v2079 = vmul.f32 %v1988, %v1902
      %v2080 = vmul.f32 %v1988, %v1903
      %v2081 = vmul.f32 %v1988, %v1904
      %v2082 = vmul.f32 %v1988, %v1905
      %v2083 = vmul.f32 %v1988, %v1906
      %v2084 = vmul.f32 %v1988, %v1907
      %v2085 = vmul.f32 %v1993, %v1908
      %v2086 = vmul.f32 %v1993, %v1909
      %v2087 = vmul.f32 %v1993, %v1910
      %v2088 = vmul.f32 %v1993, %v1911
      %v2089 = vmul.f32 %v1993, %v1912
      %v2090 = vmul.f32 %v1993, %v1913
      %v2091 = vmul.f32 %v1993, %v1914
      %v2092 = vmul.f32 %v1993, %v1915
      %v2093 = vmul.f32 %v1993, %v1916
      %v2094 = vmul.f32 %v1993, %v1917
      %v2095 = vmul.f32 %v1993, %v1918
      %v2096 = vmul.f32 %v1993, %v1919
      %v2097 = vmul.f32 %v1993, %v1920
      %v2098 = vmul.f32 %v1993, %v1921
      %v2099 = vmul.f32 %v1993, %v1922
      %v2100 = vmul.f32 %v1993, %v1923
      %v2101 = vmul.f32 %v1998, %v1924
      %v2102 = vmul.f32 %v1998, %v1925
      %v2103 = vmul.f32 %v1998, %v1926
      %v2104 = vmul.f32 %v1998, %v1927
      %v2105 = vmul.f32 %v1998, %v1928
      %v2106 = vmul.f32 %v1998, %v1929
      %v2107 = vmul.f32 %v1998, %v1930
      %v2108 = vmul.f32 %v1998, %v1931
      %v2109 = vmul.f32 %v1998, %v1932
      %v2110 = vmul.f32 %v1998, %v1933
      %v2111 = vmul.f32 %v1998, %v1934
      %v2112 = vmul.f32 %v1998, %v1935
      %v2113 = vmul.f32 %v1998, %v1936
      %v2114 = vmul.f32 %v1998, %v1937
      %v2115 = vmul.f32 %v1998, %v1938
      %v2116 = vmul.f32 %v1998, %v1939
      %v2117 = vmul.f32 %v2003, %v1940
      %v2118 = vmul.f32 %v2003, %v1941
      %v2119 = vmul.f32 %v2003, %v1942
      %v2120 = vmul.f32 %v2003, %v1943
      %v2121 = vmul.f32 %v2003, %v1944
      %v2122 = vmul.f32 %v2003, %v1945
      %v2123 = vmul.f32 %v2003, %v1946
      %v2124 = vmul.f32 %v2003, %v1947
      %v2125 = vmul.f32 %v2003, %v1948
      %v2126 = vmul.f32 %v2003, %v1949
      %v2127 = vmul.f32 %v2003, %v1950
      %v2128 = vmul.f32 %v2003, %v1951
      %v2129 = vmul.f32 %v2003, %v1952
      %v2130 = vmul.f32 %v2003, %v1953
      %v2131 = vmul.f32 %v2003, %v1954
      %v2132 = vmul.f32 %v2003, %v1955
      %v2133 = vadd.f32 %v2005, %v2021
      %v2134 = vadd.f32 %v2133, %v2037
      %v2135 = vadd.f32 %v2134, %v2053
      %v2136 = vrot.slane %v2135, 4
      %v2137 = vadd.f32 %v2135, %v2136
      %v2138 = vrot.slane %v2137, 2
      %v2139 = vadd.f32 %v2137, %v2138
      %v2140 = vrot.slane %v2139, 1
      %v2141 = vadd.f32 %v2139, %v2140
      %v2142 = vadd.f32 %v2006, %v2022
      %v2143 = vadd.f32 %v2142, %v2038
      %v2144 = vadd.f32 %v2143, %v2054
      %v2145 = vrot.slane %v2144, 4
      %v2146 = vadd.f32 %v2144, %v2145
      %v2147 = vrot.slane %v2146, 2
      %v2148 = vadd.f32 %v2146, %v2147
      %v2149 = vrot.slane %v2148, 1
      %v2150 = vadd.f32 %v2148, %v2149
      %v2151 = vadd.f32 %v2007, %v2023
      %v2152 = vadd.f32 %v2151, %v2039
      %v2153 = vadd.f32 %v2152, %v2055
      %v2154 = vrot.slane %v2153, 4
      %v2155 = vadd.f32 %v2153, %v2154
      %v2156 = vrot.slane %v2155, 2
      %v2157 = vadd.f32 %v2155, %v2156
      %v2158 = vrot.slane %v2157, 1
      %v2159 = vadd.f32 %v2157, %v2158
      %v2160 = vadd.f32 %v2008, %v2024
      %v2161 = vadd.f32 %v2160, %v2040
      %v2162 = vadd.f32 %v2161, %v2056
      %v2163 = vrot.slane %v2162, 4
      %v2164 = vadd.f32 %v2162, %v2163
      %v2165 = vrot.slane %v2164, 2
      %v2166 = vadd.f32 %v2164, %v2165
      %v2167 = vrot.slane %v2166, 1
      %v2168 = vadd.f32 %v2166, %v2167
      %v2169 = vadd.f32 %v2009, %v2025
      %v2170 = vadd.f32 %v2169, %v2041
      %v2171 = vadd.f32 %v2170, %v2057
      %v2172 = vrot.slane %v2171, 4
      %v2173 = vadd.f32 %v2171, %v2172
      %v2174 = vrot.slane %v2173, 2
      %v2175 = vadd.f32 %v2173, %v2174
      %v2176 = vrot.slane %v2175, 1
      %v2177 = vadd.f32 %v2175, %v2176
      %v2178 = vadd.f32 %v2010, %v2026
      %v2179 = vadd.f32 %v2178, %v2042
      %v2180 = vadd.f32 %v2179, %v2058
      %v2181 = vrot.slane %v2180, 4
      %v2182 = vadd.f32 %v2180, %v2181
      %v2183 = vrot.slane %v2182, 2
      %v2184 = vadd.f32 %v2182, %v2183
      %v2185 = vrot.slane %v2184, 1
      %v2186 = vadd.f32 %v2184, %v2185
      %v2187 = vadd.f32 %v2011, %v2027
      %v2188 = vadd.f32 %v2187, %v2043
      %v2189 = vadd.f32 %v2188, %v2059
      %v2190 = vrot.slane %v2189, 4
      %v2191 = vadd.f32 %v2189, %v2190
      %v2192 = vrot.slane %v2191, 2
      %v2193 = vadd.f32 %v2191, %v2192
      %v2194 = vrot.slane %v2193, 1
      %v2195 = vadd.f32 %v2193, %v2194
      %v2196 = vadd.f32 %v2012, %v2028
      %v2197 = vadd.f32 %v2196, %v2044
      %v2198 = vadd.f32 %v2197, %v2060
      %v2199 = vrot.slane %v2198, 4
      %v2200 = vadd.f32 %v2198, %v2199
      %v2201 = vrot.slane %v2200, 2
      %v2202 = vadd.f32 %v2200, %v2201
      %v2203 = vrot.slane %v2202, 1
      %v2204 = vadd.f32 %v2202, %v2203
      %v2205 = vadd.f32 %v2013, %v2029
      %v2206 = vadd.f32 %v2205, %v2045
      %v2207 = vadd.f32 %v2206, %v2061
      %v2208 = vrot.slane %v2207, 4
      %v2209 = vadd.f32 %v2207, %v2208
      %v2210 = vrot.slane %v2209, 2
      %v2211 = vadd.f32 %v2209, %v2210
      %v2212 = vrot.slane %v2211, 1
      %v2213 = vadd.f32 %v2211, %v2212
      %v2214 = vadd.f32 %v2014, %v2030
      %v2215 = vadd.f32 %v2214, %v2046
      %v2216 = vadd.f32 %v2215, %v2062
      %v2217 = vrot.slane %v2216, 4
      %v2218 = vadd.f32 %v2216, %v2217
      %v2219 = vrot.slane %v2218, 2
      %v2220 = vadd.f32 %v2218, %v2219
      %v2221 = vrot.slane %v2220, 1
      %v2222 = vadd.f32 %v2220, %v2221
      %v2223 = vadd.f32 %v2015, %v2031
      %v2224 = vadd.f32 %v2223, %v2047
      %v2225 = vadd.f32 %v2224, %v2063
      %v2226 = vrot.slane %v2225, 4
      %v2227 = vadd.f32 %v2225, %v2226
      %v2228 = vrot.slane %v2227, 2
      %v2229 = vadd.f32 %v2227, %v2228
      %v2230 = vrot.slane %v2229, 1
      %v2231 = vadd.f32 %v2229, %v2230
      %v2232 = vadd.f32 %v2016, %v2032
      %v2233 = vadd.f32 %v2232, %v2048
      %v2234 = vadd.f32 %v2233, %v2064
      %v2235 = vrot.slane %v2234, 4
      %v2236 = vadd.f32 %v2234, %v2235
      %v2237 = vrot.slane %v2236, 2
      %v2238 = vadd.f32 %v2236, %v2237
      %v2239 = vrot.slane %v2238, 1
      %v2240 = vadd.f32 %v2238, %v2239
      %v2241 = vadd.f32 %v2017, %v2033
      %v2242 = vadd.f32 %v2241, %v2049
      %v2243 = vadd.f32 %v2242, %v2065
      %v2244 = vrot.slane %v2243, 4
      %v2245 = vadd.f32 %v2243, %v2244
      %v2246 = vrot.slane %v2245, 2
      %v2247 = vadd.f32 %v2245, %v2246
      %v2248 = vrot.slane %v2247, 1
      %v2249 = vadd.f32 %v2247, %v2248
      %v2250 = vadd.f32 %v2018, %v2034
      %v2251 = vadd.f32 %v2250, %v2050
      %v2252 = vadd.f32 %v2251, %v2066
      %v2253 = vrot.slane %v2252, 4
      %v2254 = vadd.f32 %v2252, %v2253
      %v2255 = vrot.slane %v2254, 2
      %v2256 = vadd.f32 %v2254, %v2255
      %v2257 = vrot.slane %v2256, 1
      %v2258 = vadd.f32 %v2256, %v2257
      %v2259 = vadd.f32 %v2019, %v2035
      %v2260 = vadd.f32 %v2259, %v2051
      %v2261 = vadd.f32 %v2260, %v2067
      %v2262 = vrot.slane %v2261, 4
      %v2263 = vadd.f32 %v2261, %v2262
      %v2264 = vrot.slane %v2263, 2
      %v2265 = vadd.f32 %v2263, %v2264
      %v2266 = vrot.slane %v2265, 1
      %v2267 = vadd.f32 %v2265, %v2266
      %v2268 = vadd.f32 %v2020, %v2036
      %v2269 = vadd.f32 %v2268, %v2052
      %v2270 = vadd.f32 %v2269, %v2068
      %v2271 = vrot.slane %v2270, 4
      %v2272 = vadd.f32 %v2270, %v2271
      %v2273 = vrot.slane %v2272, 2
      %v2274 = vadd.f32 %v2272, %v2273
      %v2275 = vrot.slane %v2274, 1
      %v2276 = vadd.f32 %v2274, %v2275
      %v2277 = vadd.f32 %v2069, %v2085
      %v2278 = vadd.f32 %v2277, %v2101
      %v2279 = vadd.f32 %v2278, %v2117
      %v2280 = vrot.slane %v2279, 4
      %v2281 = vadd.f32 %v2279, %v2280
      %v2282 = vrot.slane %v2281, 2
      %v2283 = vadd.f32 %v2281, %v2282
      %v2284 = vrot.slane %v2283, 1
      %v2285 = vadd.f32 %v2283, %v2284
      %v2286 = vadd.f32 %v2070, %v2086
      %v2287 = vadd.f32 %v2286, %v2102
      %v2288 = vadd.f32 %v2287, %v2118
      %v2289 = vrot.slane %v2288, 4
      %v2290 = vadd.f32 %v2288, %v2289
      %v2291 = vrot.slane %v2290, 2
      %v2292 = vadd.f32 %v2290, %v2291
      %v2293 = vrot.slane %v2292, 1
      %v2294 = vadd.f32 %v2292, %v2293
      %v2295 = vadd.f32 %v2071, %v2087
      %v2296 = vadd.f32 %v2295, %v2103
      %v2297 = vadd.f32 %v2296, %v2119
      %v2298 = vrot.slane %v2297, 4
      %v2299 = vadd.f32 %v2297, %v2298
      %v2300 = vrot.slane %v2299, 2
      %v2301 = vadd.f32 %v2299, %v2300
      %v2302 = vrot.slane %v2301, 1
      %v2303 = vadd.f32 %v2301, %v2302
      %v2304 = vadd.f32 %v2072, %v2088
      %v2305 = vadd.f32 %v2304, %v2104
      %v2306 = vadd.f32 %v2305, %v2120
      %v2307 = vrot.slane %v2306, 4
      %v2308 = vadd.f32 %v2306, %v2307
      %v2309 = vrot.slane %v2308, 2
      %v2310 = vadd.f32 %v2308, %v2309
      %v2311 = vrot.slane %v2310, 1
      %v2312 = vadd.f32 %v2310, %v2311
      %v2313 = vadd.f32 %v2073, %v2089
      %v2314 = vadd.f32 %v2313, %v2105
      %v2315 = vadd.f32 %v2314, %v2121
      %v2316 = vrot.slane %v2315, 4
      %v2317 = vadd.f32 %v2315, %v2316
      %v2318 = vrot.slane %v2317, 2
      %v2319 = vadd.f32 %v2317, %v2318
      %v2320 = vrot.slane %v2319, 1
      %v2321 = vadd.f32 %v2319, %v2320
      %v2322 = vadd.f32 %v2074, %v2090
      %v2323 = vadd.f32 %v2322, %v2106
      %v2324 = vadd.f32 %v2323, %v2122
      %v2325 = vrot.slane %v2324, 4
      %v2326 = vadd.f32 %v2324, %v2325
      %v2327 = vrot.slane %v2326, 2
      %v2328 = vadd.f32 %v2326, %v2327
      %v2329 = vrot.slane %v2328, 1
      %v2330 = vadd.f32 %v2328, %v2329
      %v2331 = vadd.f32 %v2075, %v2091
      %v2332 = vadd.f32 %v2331, %v2107
      %v2333 = vadd.f32 %v2332, %v2123
      %v2334 = vrot.slane %v2333, 4
      %v2335 = vadd.f32 %v2333, %v2334
      %v2336 = vrot.slane %v2335, 2
      %v2337 = vadd.f32 %v2335, %v2336
      %v2338 = vrot.slane %v2337, 1
      %v2339 = vadd.f32 %v2337, %v2338
      %v2340 = vadd.f32 %v2076, %v2092
      %v2341 = vadd.f32 %v2340, %v2108
      %v2342 = vadd.f32 %v2341, %v2124
      %v2343 = vrot.slane %v2342, 4
      %v2344 = vadd.f32 %v2342, %v2343
      %v2345 = vrot.slane %v2344, 2
      %v2346 = vadd.f32 %v2344, %v2345
      %v2347 = vrot.slane %v2346, 1
      %v2348 = vadd.f32 %v2346, %v2347
      %v2349 = vadd.f32 %v2077, %v2093
      %v2350 = vadd.f32 %v2349, %v2109
      %v2351 = vadd.f32 %v2350, %v2125
      %v2352 = vrot.slane %v2351, 4
      %v2353 = vadd.f32 %v2351, %v2352
      %v2354 = vrot.slane %v2353, 2
      %v2355 = vadd.f32 %v2353, %v2354
      %v2356 = vrot.slane %v2355, 1
      %v2357 = vadd.f32 %v2355, %v2356
      %v2358 = vadd.f32 %v2078, %v2094
      %v2359 = vadd.f32 %v2358, %v2110
      %v2360 = vadd.f32 %v2359, %v2126
      %v2361 = vrot.slane %v2360, 4
      %v2362 = vadd.f32 %v2360, %v2361
      %v2363 = vrot.slane %v2362, 2
      %v2364 = vadd.f32 %v2362, %v2363
      %v2365 = vrot.slane %v2364, 1
      %v2366 = vadd.f32 %v2364, %v2365
      %v2367 = vadd.f32 %v2079, %v2095
      %v2368 = vadd.f32 %v2367, %v2111
      %v2369 = vadd.f32 %v2368, %v2127
      %v2370 = vrot.slane %v2369, 4
      %v2371 = vadd.f32 %v2369, %v2370
      %v2372 = vrot.slane %v2371, 2
      %v2373 = vadd.f32 %v2371, %v2372
      %v2374 = vrot.slane %v2373, 1
      %v2375 = vadd.f32 %v2373, %v2374
      %v2376 = vadd.f32 %v2080, %v2096
      %v2377 = vadd.f32 %v2376, %v2112
      %v2378 = vadd.f32 %v2377, %v2128
      %v2379 = vrot.slane %v2378, 4
      %v2380 = vadd.f32 %v2378, %v2379
      %v2381 = vrot.slane %v2380, 2
      %v2382 = vadd.f32 %v2380, %v2381
      %v2383 = vrot.slane %v2382, 1
      %v2384 = vadd.f32 %v2382, %v2383
      %v2385 = vadd.f32 %v2081, %v2097
      %v2386 = vadd.f32 %v2385, %v2113
      %v2387 = vadd.f32 %v2386, %v2129
      %v2388 = vrot.slane %v2387, 4
      %v2389 = vadd.f32 %v2387, %v2388
      %v2390 = vrot.slane %v2389, 2
      %v2391 = vadd.f32 %v2389, %v2390
      %v2392 = vrot.slane %v2391, 1
      %v2393 = vadd.f32 %v2391, %v2392
      %v2394 = vadd.f32 %v2082, %v2098
      %v2395 = vadd.f32 %v2394, %v2114
      %v2396 = vadd.f32 %v2395, %v2130
      %v2397 = vrot.slane %v2396, 4
      %v2398 = vadd.f32 %v2396, %v2397
      %v2399 = vrot.slane %v2398, 2
      %v2400 = vadd.f32 %v2398, %v2399
      %v2401 = vrot.slane %v2400, 1
      %v2402 = vadd.f32 %v2400, %v2401
      %v2403 = vadd.f32 %v2083, %v2099
      %v2404 = vadd.f32 %v2403, %v2115
      %v2405 = vadd.f32 %v2404, %v2131
      %v2406 = vrot.slane %v2405, 4
      %v2407 = vadd.f32 %v2405, %v2406
      %v2408 = vrot.slane %v2407, 2
      %v2409 = vadd.f32 %v2407, %v2408
      %v2410 = vrot.slane %v2409, 1
      %v2411 = vadd.f32 %v2409, %v2410
      %v2412 = vadd.f32 %v2084, %v2100
      %v2413 = vadd.f32 %v2412, %v2116
      %v2414 = vadd.f32 %v2413, %v2132
      %v2415 = vrot.slane %v2414, 4
      %v2416 = vadd.f32 %v2414, %v2415
      %v2417 = vrot.slane %v2416, 2
      %v2418 = vadd.f32 %v2416, %v2417
      %v2419 = vrot.slane %v2418, 1
      %v2420 = vadd.f32 %v2418, %v2419
      %2422 = vset.pattern.permute.xlu0 0
      %2423 = vperm.xlu0 %2422, %v1964
      %v2424 = vpop.permute.xlu0 %2423
      %v2425 = vrot.slane %v2424, 1
      %v2428 = vadd.f32 %v2141, %v2424
      %v2429 = vadd.f32 %v2150, %v2424
      %v2430 = vadd.f32 %v2159, %v2424
      %v2431 = vadd.f32 %v2168, %v2424
      %v2432 = vadd.f32 %v2177, %v2424
      %v2433 = vadd.f32 %v2186, %v2424
      %v2434 = vadd.f32 %v2195, %v2424
      %v2435 = vadd.f32 %v2204, %v2424
      %v2436 = vadd.f32 %v2213, %v2424
      %v2437 = vadd.f32 %v2222, %v2424
      %v2438 = vadd.f32 %v2231, %v2424
      %v2439 = vadd.f32 %v2240, %v2424
      %v2440 = vadd.f32 %v2249, %v2424
      %v2441 = vadd.f32 %v2258, %v2424
      %v2442 = vadd.f32 %v2267, %v2424
      %v2443 = vadd.f32 %v2276, %v2424
      %v2444 = vadd.f32 %v2285, %v2425
      %v2445 = vadd.f32 %v2294, %v2425
      %v2446 = vadd.f32 %v2303, %v2425
      %v2447 = vadd.f32 %v2312, %v2425
      %v2448 = vadd.f32 %v2321, %v2425
      %v2449 = vadd.f32 %v2330, %v2425
      %v2450 = vadd.f32 %v2339, %v2425
      %v2451 = vadd.f32 %v2348, %v2425
      %v2452 = vadd.f32 %v2357, %v2425
      %v2453 = vadd.f32 %v2366, %v2425
      %v2454 = vadd.f32 %v2375, %v2425
      %v2455 = vadd.f32 %v2384, %v2425
      %v2456 = vadd.f32 %v2393, %v2425
      %v2457 = vadd.f32 %v2402, %v2425
      %v2458 = vadd.f32 %v2411, %v2425
      %v2459 = vadd.f32 %v2420, %v2425
      %v2492 = vcombine.low %v2428, %v2429
      %v2493 = vcombine.low %v2430, %v2431
      %v2495 = vunpack.c.l.s4 1983009808
      %v2496 = vunpack.c.0.s8 %v2495
      %v2497 = vlaneseq
      %v2498 = vshrl.u32 %v2497, 7
      %v2499 = vsub.s32 %v2496, %v2498
      %v2500 = vrot.slane %v2492, %v2499
      %v2502 = vunpack.c.l.s4 1983009808
      %v2503 = vunpack.c.0.s8 %v2502
      %v2504 = vlaneseq
      %v2505 = vshrl.u32 %v2504, 7
      %v2506 = vsub.s32 %v2503, %v2505
      %v2507 = vrot.slane %v2493, %v2506
      %v2508 = vcombine.low %v2500, %v2507
      %v2509 = vcombine.low %v2432, %v2433
      %v2510 = vcombine.low %v2434, %v2435
      %v2512 = vunpack.c.l.s4 1983009808
      %v2513 = vunpack.c.0.s8 %v2512
      %v2514 = vlaneseq
      %v2515 = vshrl.u32 %v2514, 7
      %v2516 = vsub.s32 %v2513, %v2515
      %v2517 = vrot.slane %v2509, %v2516
      %v2519 = vunpack.c.l.s4 1983009808
      %v2520 = vunpack.c.0.s8 %v2519
      %v2521 = vlaneseq
      %v2522 = vshrl.u32 %v2521, 7
      %v2523 = vsub.s32 %v2520, %v2522
      %v2524 = vrot.slane %v2510, %v2523
      %v2525 = vcombine.low %v2517, %v2524
      %v2526 = vcombine.low %v2436, %v2437
      %v2527 = vcombine.low %v2438, %v2439
      %v2529 = vunpack.c.l.s4 1983009808
      %v2530 = vunpack.c.0.s8 %v2529
      %v2531 = vlaneseq
      %v2532 = vshrl.u32 %v2531, 7
      %v2533 = vsub.s32 %v2530, %v2532
      %v2534 = vrot.slane %v2526, %v2533
      %v2536 = vunpack.c.l.s4 1983009808
      %v2537 = vunpack.c.0.s8 %v2536
      %v2538 = vlaneseq
      %v2539 = vshrl.u32 %v2538, 7
      %v2540 = vsub.s32 %v2537, %v2539
      %v2541 = vrot.slane %v2527, %v2540
      %v2542 = vcombine.low %v2534, %v2541
      %v2543 = vcombine.low %v2440, %v2441
      %v2544 = vcombine.low %v2442, %v2443
      %v2546 = vunpack.c.l.s4 1983009808
      %v2547 = vunpack.c.0.s8 %v2546
      %v2548 = vlaneseq
      %v2549 = vshrl.u32 %v2548, 7
      %v2550 = vsub.s32 %v2547, %v2549
      %v2551 = vrot.slane %v2543, %v2550
      %v2553 = vunpack.c.l.s4 1983009808
      %v2554 = vunpack.c.0.s8 %v2553
      %v2555 = vlaneseq
      %v2556 = vshrl.u32 %v2555, 7
      %v2557 = vsub.s32 %v2554, %v2556
      %v2558 = vrot.slane %v2544, %v2557
      %v2559 = vcombine.low %v2551, %v2558
      %v2560 = vcombine.low %v2444, %v2445
      %v2561 = vcombine.low %v2446, %v2447
      %v2563 = vunpack.c.l.s4 1983009808
      %v2564 = vunpack.c.0.s8 %v2563
      %v2565 = vlaneseq
      %v2566 = vshrl.u32 %v2565, 7
      %v2567 = vsub.s32 %v2564, %v2566
      %v2568 = vrot.slane %v2560, %v2567
      %v2570 = vunpack.c.l.s4 1983009808
      %v2571 = vunpack.c.0.s8 %v2570
      %v2572 = vlaneseq
      %v2573 = vshrl.u32 %v2572, 7
      %v2574 = vsub.s32 %v2571, %v2573
      %v2575 = vrot.slane %v2561, %v2574
      %v2576 = vcombine.low %v2568, %v2575
      %v2577 = vcombine.low %v2448, %v2449
      %v2578 = vcombine.low %v2450, %v2451
      %v2580 = vunpack.c.l.s4 1983009808
      %v2581 = vunpack.c.0.s8 %v2580
      %v2582 = vlaneseq
      %v2583 = vshrl.u32 %v2582, 7
      %v2584 = vsub.s32 %v2581, %v2583
      %v2585 = vrot.slane %v2577, %v2584
      %v2587 = vunpack.c.l.s4 1983009808
      %v2588 = vunpack.c.0.s8 %v2587
      %v2589 = vlaneseq
      %v2590 = vshrl.u32 %v2589, 7
      %v2591 = vsub.s32 %v2588, %v2590
      %v2592 = vrot.slane %v2578, %v2591
      %v2593 = vcombine.low %v2585, %v2592
      %v2594 = vcombine.low %v2452, %v2453
      %v2595 = vcombine.low %v2454, %v2455
      %v2597 = vunpack.c.l.s4 1983009808
      %v2598 = vunpack.c.0.s8 %v2597
      %v2599 = vlaneseq
      %v2600 = vshrl.u32 %v2599, 7
      %v2601 = vsub.s32 %v2598, %v2600
      %v2602 = vrot.slane %v2594, %v2601
      %v2604 = vunpack.c.l.s4 1983009808
      %v2605 = vunpack.c.0.s8 %v2604
      %v2606 = vlaneseq
      %v2607 = vshrl.u32 %v2606, 7
      %v2608 = vsub.s32 %v2605, %v2607
      %v2609 = vrot.slane %v2595, %v2608
      %v2610 = vcombine.low %v2602, %v2609
      %v2611 = vcombine.low %v2456, %v2457
      %v2612 = vcombine.low %v2458, %v2459
      %v2614 = vunpack.c.l.s4 1983009808
      %v2615 = vunpack.c.0.s8 %v2614
      %v2616 = vlaneseq
      %v2617 = vshrl.u32 %v2616, 7
      %v2618 = vsub.s32 %v2615, %v2617
      %v2619 = vrot.slane %v2611, %v2618
      %v2621 = vunpack.c.l.s4 1983009808
      %v2622 = vunpack.c.0.s8 %v2621
      %v2623 = vlaneseq
      %v2624 = vshrl.u32 %v2623, 7
      %v2625 = vsub.s32 %v2622, %v2624
      %v2626 = vrot.slane %v2612, %v2625
      %v2627 = vcombine.low %v2619, %v2626
      %vm2628 = vcmask 1044484
      %v2629 = vsel %vm2628, %v2508, %v2508
      %vm2630 = vcmask 1046534
      %v2631 = vsel %vm2630, %v2508, %v2629
      %v2632 = vrot.slane %v2576, 7
      %vm2633 = vcmask 1041409
      %v2634 = vsel %vm2633, %v2632, %v2631
      %vm2635 = vcmask 1043459
      %v2636 = vsel %vm2635, %v2632, %v2634
      %vm2637 = vcmask 1045509
      %v2638 = vsel %vm2637, %v2632, %v2636
      %vm2639 = vcmask 1047559
      %v2640 = vsel %vm2639, %v2632, %v2638
      %v2641 = vsel %vm2628, %v2525, %v2525
      %v2642 = vsel %vm2630, %v2525, %v2641
      %v2643 = vrot.slane %v2593, 7
      %v2644 = vsel %vm2633, %v2643, %v2642
      %v2645 = vsel %vm2635, %v2643, %v2644
      %v2646 = vsel %vm2637, %v2643, %v2645
      %v2647 = vsel %vm2639, %v2643, %v2646
      %v2648 = vsel %vm2628, %v2542, %v2542
      %v2649 = vsel %vm2630, %v2542, %v2648
      %v2650 = vrot.slane %v2610, 7
      %v2651 = vsel %vm2633, %v2650, %v2649
      %v2652 = vsel %vm2635, %v2650, %v2651
      %v2653 = vsel %vm2637, %v2650, %v2652
      %v2654 = vsel %vm2639, %v2650, %v2653
      %v2655 = vsel %vm2628, %v2559, %v2559
      %v2656 = vsel %vm2630, %v2559, %v2655
      %v2657 = vrot.slane %v2627, 7
      %v2658 = vsel %vm2633, %v2657, %v2656
      %v2659 = vsel %vm2635, %v2657, %v2658
      %v2660 = vsel %vm2637, %v2657, %v2659
      %v2661 = vsel %vm2639, %v2657, %v2660
      %2666 = vst [vmem:[%s277] sm:$0xff] %v2640
      %2667 = vst [vmem:[%s277 + $0x8] sm:$0xff] %v2647
      %2668 = vst [vmem:[%s277 + $0x10] sm:$0xff] %v2654
      %2669 = vst [vmem:[%s277 + $0x18] sm:$0xff] %v2661
      %s2670 = smul.u32 16, %s18
      %p2671 = scmp.lt.s32.totalorder %s2670, 31
      %s2672 = scalar_select %p2671, %s2670, 31
      %s2673 = smul.addr %s2672, 2
      %s2674 = scalar_lea.vmem %s7, %s2673
      // Predicated region
      $region49: #{_fused_forward.1} parent=47 // pred_check
        %p2675 = pneg %p188
      $region50: #{_fused_forward.1} parent=47 // pred_check_branch
        %2677 = sbr.rel (%p2675) target = $region52
      $region51: #{_fused_forward.1} parent=47 // pred_region
        %s2678 = smul.u32 16, %s18
      $region52: #{_fused_forward.1} parent=47 // pred_fallthru
        _
    $region48: #{_fused_forward.1} parent=5 // pred_fallthru
      _
    %p2679 = scmp.le.s32.totalorder 2, %s13
    // Predicated region
    $region53: #{_fused_forward.1} parent=5 // pred_check
      %p2680 = pneg %p2679
    $region54: #{_fused_forward.1} parent=5 // pred_check_branch
      %2682 = sbr.rel (%p2680) target = $region56
    $region55: #{_fused_forward.1} parent=5 // pred_region
      %s2683 = ssub.s32 %s13, 2
      // Predicated region
      $region57: #{_fused_forward.1} parent=55 // pred_check
        %p2684 = pneg %p194
      $region58: #{_fused_forward.1} parent=55 // pred_check_branch
        %2686 = sbr.rel (%p2684) target = $region60
      $region59: #{_fused_forward.1} parent=55 // pred_region
        %s2687 = smul.u32 16, %s19
        %p2688 = scmp.lt.s32.totalorder %s2687, 31
        %s2689 = scalar_select %p2688, %s2687, 31
        %s2690 = smul.addr %s2689, 2
        %s2691 = scalar_lea.vmem %s7, %s2690
      $region60: #{_fused_forward.1} parent=55 // pred_fallthru
        _
    $region56: #{_fused_forward.1} parent=5 // pred_fallthru
      _
  $region6: #{_fused_forward.1} parent=0 // loop_footer
    %s17 = sadd.s32 1, %s13
  $region7: #{_fused_forward.1} parent=0 // loop_footer_branch
    %12 = sbr.rel target = $region3
  $region8: #{_fused_forward.1} parent=0 // loop_exit
    _

</llo_original>
